<compile_context>
chip_gen: v7x
topology: tpu7x:2x2x1
jax: 0.10.0
libtpu: 0.0.40
codegen_flags: <defaults>
</compile_context>

<pallas_src>
import jax
import jax.numpy as jnp
from jax.experimental import pallas as pl
from jax.experimental.pallas import tpu as pltpu

BN_EPS = 1e-5


def _make_resblock_kernel(N, H, W, Cin, Cout, use_11conv, *, P, M, Wp):
    """Fused ResidualBlock kernel for static shapes / branch.

    P  : lane-dense flat padded spatial length (multiple of 128)
    M  : lane margin (= Wp + 1) covering the largest 3x3 tap offset
    Wp : padded width (W + 2)
    """
    offsets = [(dy - 1) * Wp + (dx - 1) for dy in range(3) for dx in range(3)]
    inv_cnt = 1.0 / float(N * H * W)

    def _bn(h, g, be, mask):
        # Training-mode BN over valid pixels only (biased variance), single-pass
        # masked sums over the lane axis; affine folded into one scale/shift.
        hm = h * mask
        s = jnp.sum(hm, axis=1, keepdims=True)            # (C, 1)
        ss = jnp.sum(hm * hm, axis=1, keepdims=True)      # (C, 1)
        mean = s * inv_cnt
        var = ss * inv_cnt - mean * mean
        scale = g * jax.lax.rsqrt(var + BN_EPS)           # EUP
        shift = be - mean * scale
        return h * scale + shift

    def kernel(*refs):
        if use_11conv:
            (x_im_ref, x_side_ref, mask_ref,
             w1_ref, b1_ref, g1_ref, be1_ref,
             w2_ref, b2_ref, g2_ref, be2_ref,
             ws_ref, bs_ref, o_ref, hbuf_ref, col_ref) = refs
        else:
            (x_im_ref, x_side_ref, mask_ref,
             w1_ref, b1_ref, g1_ref, be1_ref,
             w2_ref, b2_ref, g2_ref, be2_ref,
             o_ref, hbuf_ref, col_ref) = refs

        mask = mask_ref[...]                              # (1, P), 1.0 at valid pixels

        # ---- conv1 as ONE matmul: gather 9 shifted taps into im2col rows ----
        for t, off in enumerate(offsets):
            col_ref[t * Cin:(t + 1) * Cin, :] = x_im_ref[:, M + off:M + off + P]
        h1 = jnp.dot(w1_ref[...], col_ref[0:9 * Cin, :],
                     preferred_element_type=jnp.float32) + b1_ref[...]
        # BN1 + ReLU; the mask multiply re-zeroes halo/tail lanes, which IS the
        # zero padding conv2 needs.
        h1 = jnp.maximum(_bn(h1, g1_ref[...], be1_ref[...], mask), 0.0) * mask

        # ---- conv2: stage h1 into a margin buffer (only the halo lanes are
        # zeroed; interior is fully overwritten), gather taps, one matmul ----
        hbuf_ref[:, 0:M] = jnp.zeros((Cout, M), jnp.float32)
        hbuf_ref[:, P + M:P + 2 * M] = jnp.zeros((Cout, M), jnp.float32)
        hbuf_ref[:, M:M + P] = h1
        for t, off in enumerate(offsets):
            col_ref[t * Cout:(t + 1) * Cout, :] = hbuf_ref[:, M + off:M + off + P]
        h2 = jnp.dot(w2_ref[...], col_ref[0:9 * Cout, :],
                     preferred_element_type=jnp.float32) + b2_ref[...]
        h2 = _bn(h2, g2_ref[...], be2_ref[...], mask)

        # ---- shortcut: 1x1 projection or identity (lane-dense, no slicing) ----
        if use_11conv:
            side = jnp.dot(ws_ref[...], x_side_ref[...],
                           preferred_element_type=jnp.float32) + bs_ref[...]
        else:
            side = x_side_ref[...]                        # requires Cin == Cout

        o_ref[...] = jnp.maximum(h2 + side, 0.0)          # lane-dense (Cout, P) store

    return kernel


def residual_block_forward(x_nchw, params, *, use_11conv, stride=1):
    """Pallas forward. x_nchw: (N, Cin, H, W) float32; params in torch layouts."""
    # TODO(synk): stride > 1 not implemented (module default stride=1 is used).
    assert stride == 1, "only stride=1 supported"
    N, Cin, H, W = x_nchw.shape
    Cout = params["w1"].shape[0]
    Hp, Wp = H + 2, W + 2
    Nf = N * Hp * Wp                        # flat padded spatial length
    P = ((Nf + 127) // 128) * 128           # lane-dense length (multiple of 128)
    M = Wp + 1                              # margin covering max tap offset

    x = x_nchw.astype(jnp.float32)
    xpad = jnp.pad(x, ((0, 0), (0, 0), (1, 1), (1, 1)))            # (N, Cin, Hp, Wp)
    x_cf = jnp.transpose(xpad, (1, 0, 2, 3)).reshape(Cin, Nf)      # (Cin, Nf)
    x_side = jnp.pad(x_cf, ((0, 0), (0, P - Nf)))                  # (Cin, P)
    x_im = jnp.pad(x_cf, ((0, 0), (M, P - Nf + M)))                # (Cin, P + 2M)

    valid = jnp.zeros((N, Hp, Wp), jnp.float32).at[:, 1:H + 1, 1:W + 1].set(1.0)
    mask = jnp.pad(valid.reshape(1, Nf), ((0, 0), (0, P - Nf)))    # (1, P)

    def w3x3(w):   # torch (Cout, C, 3, 3) -> (Cout, 9*C); K ordered tap-major, c-minor
        return jnp.transpose(w, (0, 2, 3, 1)).reshape(w.shape[0], 9 * w.shape[1]).astype(jnp.float32)

    def vec(v):    # (C,) -> (C, 1) broadcasting over the lane (spatial) axis
        return v.reshape(-1, 1).astype(jnp.float32)

    inputs = [
        x_im, x_side, mask,
        w3x3(params["w1"]), vec(params["b1"]), vec(params["g1"]), vec(params["be1"]),
        w3x3(params["w2"]), vec(params["b2"]), vec(params["g2"]), vec(params["be2"]),
    ]
    if use_11conv:
        inputs += [params["ws"][:, :, 0, 0].astype(jnp.float32),   # (Cout, Cin)
                   vec(params["bs"])]
    else:
        assert Cin == Cout, "identity shortcut requires Cin == Cout"

    kernel = _make_resblock_kernel(N, H, W, Cin, Cout, use_11conv, P=P, M=M, Wp=Wp)

    # TODO(synk): a band-tiled parallel grid (for the second v7x TensorCore / VMEM
    # budgets at large shapes) is omitted: train-mode BatchNorm needs full-batch
    # statistics, which would require a cross-band two-pass reduction.
    out_flat = pl.pallas_call(
        kernel,
        out_shape=jax.ShapeDtypeStruct((Cout, P), jnp.float32),
        in_specs=[pl.BlockSpec(memory_space=pltpu.MemorySpace.VMEM)] * len(inputs),
        out_specs=pl.BlockSpec(memory_space=pltpu.MemorySpace.VMEM),
        scratch_shapes=[
            pltpu.VMEM((Cout, P + 2 * M), jnp.float32),            # margin-padded h1
            pltpu.VMEM((9 * max(Cin, Cout), P), jnp.float32),      # im2col assembly
        ],
        compiler_params=pltpu.CompilerParams(vmem_limit_bytes=32 * 1024 * 1024),
    )(*inputs)

    out = out_flat[:, :Nf].reshape(Cout, N, Hp, Wp)[:, :, 1:H + 1, 1:W + 1]
    return jnp.transpose(out, (1, 0, 2, 3))                        # back to NCHW


def init_params(key, Cin, Cout, use_11conv):
    """Deterministic synthetic parameters matching the module's shapes."""
    ks = jax.random.split(key, 6)
    p = {
        "w1": 0.1 * jax.random.normal(ks[0], (Cout, Cin, 3, 3), jnp.float32),
        "b1": 0.1 * jax.random.normal(ks[1], (Cout,), jnp.float32),
        "g1": jnp.ones((Cout,), jnp.float32),    # BN weight init
        "be1": jnp.zeros((Cout,), jnp.float32),  # BN bias init
        "w2": 0.1 * jax.random.normal(ks[2], (Cout, Cout, 3, 3), jnp.float32),
        "b2": 0.1 * jax.random.normal(ks[3], (Cout,), jnp.float32),
        "g2": jnp.ones((Cout,), jnp.float32),
        "be2": jnp.zeros((Cout,), jnp.float32),
    }
    if use_11conv:
        p["ws"] = 0.1 * jax.random.normal(ks[4], (Cout, Cin, 1, 1), jnp.float32)
        p["bs"] = 0.1 * jax.random.normal(ks[5], (Cout,), jnp.float32)
    return p


def residual_block_ref(x_nchw, params, *, use_11conv):
    """Pure-JAX reference matching the PyTorch forward (train-mode BN)."""
    x = jnp.transpose(x_nchw, (0, 2, 3, 1)).astype(jnp.float32)

    def conv(h, w_t, b, pad):
        w = jnp.transpose(w_t, (2, 3, 1, 0))  # HWIO
        y = jax.lax.conv_general_dilated(
            h, w, window_strides=(1, 1), padding=((pad, pad), (pad, pad)),
            dimension_numbers=("NHWC", "HWIO", "NHWC"))
        return y + b.reshape(1, 1, 1, -1)

    def bn(h, g, b):
        m = jnp.mean(h, axis=(0, 1, 2), keepdims=True)
        d = h - m
        v = jnp.mean(d * d, axis=(0, 1, 2), keepdims=True)
        return g.reshape(1, 1, 1, -1) * d * jax.lax.rsqrt(v + BN_EPS) + b.reshape(1, 1, 1, -1)

    h = conv(x, params["w1"], params["b1"], 1)
    h = jnp.maximum(bn(h, params["g1"], params["be1"]), 0.0)
    h = conv(h, params["w2"], params["b2"], 1)
    h = bn(h, params["g2"], params["be2"])
    s = conv(x, params["ws"], params["bs"], 0) if use_11conv else x
    y = jnp.maximum(h + s, 0.0)
    return jnp.transpose(y, (0, 3, 1, 2))


if __name__ == "__main__":
    key = jax.random.PRNGKey(0)
    kx, kp1, kp2 = jax.random.split(key, 3)

    # Case 1: projection shortcut (use_11conv=True), Cin=4 -> Cout=8
    x = jax.random.normal(kx, (2, 4, 16, 16), jnp.float32)
    p1 = init_params(kp1, 4, 8, True)
    y1 = jax.block_until_ready(residual_block_forward(x, p1, use_11conv=True))
    r1 = residual_block_ref(x, p1, use_11conv=True)
    assert y1.shape == (2, 8, 16, 16)
    assert jnp.allclose(y1, r1, rtol=1e-4, atol=1e-4), float(jnp.max(jnp.abs(y1 - r1)))

    # Case 2: identity shortcut (use_11conv=False), Cin == Cout == 4
    p2 = init_params(kp2, 4, 4, False)
    y2 = jax.block_until_ready(residual_block_forward(x, p2, use_11conv=False))
    r2 = residual_block_ref(x, p2, use_11conv=False)
    assert y2.shape == (2, 4, 16, 16)
    assert jnp.allclose(y2, r2, rtol=1e-4, atol=1e-4), float(jnp.max(jnp.abs(y2 - r2)))

    print("KERNEL_OK")
</pallas_src>

<mosaic_0001>
module attributes {stable_mosaic.version = 11 : i64} {
  func.func @kernel(%arg0: memref<4x806xf32, #tpu.memory_space<vmem>>, %arg1: memref<4x768xf32, #tpu.memory_space<vmem>>, %arg2: memref<1x768xf32, #tpu.memory_space<vmem>>, %arg3: memref<8x36xf32, #tpu.memory_space<vmem>>, %arg4: memref<8x1xf32, #tpu.memory_space<vmem>>, %arg5: memref<8x1xf32, #tpu.memory_space<vmem>>, %arg6: memref<8x1xf32, #tpu.memory_space<vmem>>, %arg7: memref<8x72xf32, #tpu.memory_space<vmem>>, %arg8: memref<8x1xf32, #tpu.memory_space<vmem>>, %arg9: memref<8x1xf32, #tpu.memory_space<vmem>>, %arg10: memref<8x1xf32, #tpu.memory_space<vmem>>, %arg11: memref<8x4xf32, #tpu.memory_space<vmem>>, %arg12: memref<8x1xf32, #tpu.memory_space<vmem>>, %arg13: memref<8x768xf32, #tpu.memory_space<vmem>>, %arg14: memref<8x806xf32, #tpu.memory_space<vmem>>, %arg15: memref<72x768xf32, #tpu.memory_space<vmem>>) attributes {dimension_semantics = [], scalar_prefetch = 0 : i64, scratch_operands = 2 : i64, tpu.core_type = #tpu.core_type<tc>} {
    %c0 = arith.constant 0 : index
    %c0_0 = arith.constant 0 : index
    %0 = vector.load %arg2[%c0, %c0_0] : memref<1x768xf32, #tpu.memory_space<vmem>>, vector<1x768xf32>
    %c0_1 = arith.constant 0 : index
    %c0_2 = arith.constant 0 : index
    %1 = vector.load %arg0[%c0_1, %c0_2] : memref<4x806xf32, #tpu.memory_space<vmem>>, vector<4x768xf32>
    %c0_3 = arith.constant 0 : index
    %c0_4 = arith.constant 0 : index
    %2 = vector.load %arg15[%c0_3, %c0_4] : memref<72x768xf32, #tpu.memory_space<vmem>>, vector<4x768xf32>
    tpu.vector_store %arg15[%c0_3, %c0_4], %1 {strides = array<i32>} : memref<72x768xf32, #tpu.memory_space<vmem>>, vector<4x768xf32>,
    %c0_5 = arith.constant 0 : index
    %c1 = arith.constant 1 : index
    %3 = vector.load %arg0[%c0_5, %c1] : memref<4x806xf32, #tpu.memory_space<vmem>>, vector<4x768xf32>
    %c4 = arith.constant 4 : index
    %c0_6 = arith.constant 0 : index
    %4 = vector.load %arg15[%c4, %c0_6] : memref<72x768xf32, #tpu.memory_space<vmem>>, vector<4x768xf32>
    tpu.vector_store %arg15[%c4, %c0_6], %3 {strides = array<i32>} : memref<72x768xf32, #tpu.memory_space<vmem>>, vector<4x768xf32>,
    %c0_7 = arith.constant 0 : index
    %c2 = arith.constant 2 : index
    %5 = vector.load %arg0[%c0_7, %c2] : memref<4x806xf32, #tpu.memory_space<vmem>>, vector<4x768xf32>
    %c8 = arith.constant 8 : index
    %c0_8 = arith.constant 0 : index
    %6 = vector.load %arg15[%c8, %c0_8] : memref<72x768xf32, #tpu.memory_space<vmem>>, vector<4x768xf32>
    tpu.vector_store %arg15[%c8, %c0_8], %5 {strides = array<i32>} : memref<72x768xf32, #tpu.memory_space<vmem>>, vector<4x768xf32>,
    %c0_9 = arith.constant 0 : index
    %c18 = arith.constant 18 : index
    %7 = vector.load %arg0[%c0_9, %c18] : memref<4x806xf32, #tpu.memory_space<vmem>>, vector<4x768xf32>
    %c12 = arith.constant 12 : index
    %c0_10 = arith.constant 0 : index
    %8 = vector.load %arg15[%c12, %c0_10] : memref<72x768xf32, #tpu.memory_space<vmem>>, vector<4x768xf32>
    tpu.vector_store %arg15[%c12, %c0_10], %7 {strides = array<i32>} : memref<72x768xf32, #tpu.memory_space<vmem>>, vector<4x768xf32>,
    %c0_11 = arith.constant 0 : index
    %c19 = arith.constant 19 : index
    %9 = vector.load %arg0[%c0_11, %c19] : memref<4x806xf32, #tpu.memory_space<vmem>>, vector<4x768xf32>
    %c16 = arith.constant 16 : index
    %c0_12 = arith.constant 0 : index
    %10 = vector.load %arg15[%c16, %c0_12] : memref<72x768xf32, #tpu.memory_space<vmem>>, vector<4x768xf32>
    tpu.vector_store %arg15[%c16, %c0_12], %9 {strides = array<i32>} : memref<72x768xf32, #tpu.memory_space<vmem>>, vector<4x768xf32>,
    %c0_13 = arith.constant 0 : index
    %c20 = arith.constant 20 : index
    %11 = vector.load %arg0[%c0_13, %c20] : memref<4x806xf32, #tpu.memory_space<vmem>>, vector<4x768xf32>
    %c20_14 = arith.constant 20 : index
    %c0_15 = arith.constant 0 : index
    %12 = vector.load %arg15[%c20_14, %c0_15] : memref<72x768xf32, #tpu.memory_space<vmem>>, vector<4x768xf32>
    tpu.vector_store %arg15[%c20_14, %c0_15], %11 {strides = array<i32>} : memref<72x768xf32, #tpu.memory_space<vmem>>, vector<4x768xf32>,
    %c0_16 = arith.constant 0 : index
    %c36 = arith.constant 36 : index
    %13 = vector.load %arg0[%c0_16, %c36] : memref<4x806xf32, #tpu.memory_space<vmem>>, vector<4x768xf32>
    %c24 = arith.constant 24 : index
    %c0_17 = arith.constant 0 : index
    %14 = vector.load %arg15[%c24, %c0_17] : memref<72x768xf32, #tpu.memory_space<vmem>>, vector<4x768xf32>
    tpu.vector_store %arg15[%c24, %c0_17], %13 {strides = array<i32>} : memref<72x768xf32, #tpu.memory_space<vmem>>, vector<4x768xf32>,
    %c0_18 = arith.constant 0 : index
    %c37 = arith.constant 37 : index
    %15 = vector.load %arg0[%c0_18, %c37] : memref<4x806xf32, #tpu.memory_space<vmem>>, vector<4x768xf32>
    %c28 = arith.constant 28 : index
    %c0_19 = arith.constant 0 : index
    %16 = vector.load %arg15[%c28, %c0_19] : memref<72x768xf32, #tpu.memory_space<vmem>>, vector<4x768xf32>
    tpu.vector_store %arg15[%c28, %c0_19], %15 {strides = array<i32>} : memref<72x768xf32, #tpu.memory_space<vmem>>, vector<4x768xf32>,
    %c0_20 = arith.constant 0 : index
    %c38 = arith.constant 38 : index
    %17 = vector.load %arg0[%c0_20, %c38] : memref<4x806xf32, #tpu.memory_space<vmem>>, vector<4x768xf32>
    %c32 = arith.constant 32 : index
    %c0_21 = arith.constant 0 : index
    %18 = vector.load %arg15[%c32, %c0_21] : memref<72x768xf32, #tpu.memory_space<vmem>>, vector<4x768xf32>
    tpu.vector_store %arg15[%c32, %c0_21], %17 {strides = array<i32>} : memref<72x768xf32, #tpu.memory_space<vmem>>, vector<4x768xf32>,
    %c0_22 = arith.constant 0 : index
    %c0_23 = arith.constant 0 : index
    %19 = vector.load %arg3[%c0_22, %c0_23] : memref<8x36xf32, #tpu.memory_space<vmem>>, vector<8x36xf32>
    %c0_24 = arith.constant 0 : index
    %c0_25 = arith.constant 0 : index
    %20 = vector.load %arg15[%c0_24, %c0_25] : memref<72x768xf32, #tpu.memory_space<vmem>>, vector<36x768xf32>
    %cst = arith.constant dense<0.000000e+00> : vector<8x768xf32>
    %21 = tpu.matmul %19, %20, %cst {dimension_numbers = #tpu.dot_dimension_numbers<[1], [0], [0], [1], [0, 0, 1, 1], [], []>} : vector<8x36xf32>, vector<36x768xf32>, vector<8x768xf32> -> vector<8x768xf32>
    %c0_26 = arith.constant 0 : index
    %c0_27 = arith.constant 0 : index
    %22 = vector.load %arg4[%c0_26, %c0_27] : memref<8x1xf32, #tpu.memory_space<vmem>>, vector<8x1xf32>
    %23 = vector.broadcast %22 : vector<8x1xf32> to vector<8x768xf32>
    %24 = arith.addf %21, %23 : vector<8x768xf32>
    %c0_28 = arith.constant 0 : index
    %c0_29 = arith.constant 0 : index
    %25 = vector.load %arg5[%c0_28, %c0_29] : memref<8x1xf32, #tpu.memory_space<vmem>>, vector<8x1xf32>
    %c0_30 = arith.constant 0 : index
    %c0_31 = arith.constant 0 : index
    %26 = vector.load %arg6[%c0_30, %c0_31] : memref<8x1xf32, #tpu.memory_space<vmem>>, vector<8x1xf32>
    %27 = vector.broadcast %0 : vector<1x768xf32> to vector<8x768xf32>
    %28 = arith.mulf %24, %27 : vector<8x768xf32>
    %cst_32 = arith.constant dense<0.000000e+00> : vector<8xf32>
    %29 = vector.multi_reduction <add>, %28, %cst_32 [1] : vector<8x768xf32> to vector<8xf32>
    %30 = vector.shape_cast %29 : vector<8xf32> to vector<8x1xf32>
    %31 = arith.mulf %28, %28 : vector<8x768xf32>
    %cst_33 = arith.constant dense<0.000000e+00> : vector<8xf32>
    %32 = vector.multi_reduction <add>, %31, %cst_33 [1] : vector<8x768xf32> to vector<8xf32>
    %33 = vector.shape_cast %32 : vector<8xf32> to vector<8x1xf32>
    %cst_34 = arith.constant 0.001953125 : f32
    %34 = vector.broadcast %cst_34 : f32 to vector<8x1xf32>
    %35 = arith.mulf %30, %34 : vector<8x1xf32>
    %cst_35 = arith.constant 0.001953125 : f32
    %36 = vector.broadcast %cst_35 : f32 to vector<8x1xf32>
    %37 = arith.mulf %33, %36 : vector<8x1xf32>
    %38 = arith.mulf %35, %35 : vector<8x1xf32>
    %39 = arith.subf %37, %38 : vector<8x1xf32>
    %cst_36 = arith.constant 9.99999974E-6 : f32
    %40 = vector.broadcast %cst_36 : f32 to vector<8x1xf32>
    %41 = arith.addf %39, %40 : vector<8x1xf32>
    %42 = math.rsqrt %41 : vector<8x1xf32>
    %43 = arith.mulf %25, %42 : vector<8x1xf32>
    %44 = arith.mulf %35, %43 : vector<8x1xf32>
    %45 = arith.subf %26, %44 : vector<8x1xf32>
    %46 = vector.broadcast %43 : vector<8x1xf32> to vector<8x768xf32>
    %47 = arith.mulf %24, %46 : vector<8x768xf32>
    %48 = vector.broadcast %45 : vector<8x1xf32> to vector<8x768xf32>
    %49 = arith.addf %47, %48 : vector<8x768xf32>
    %cst_37 = arith.constant 0.000000e+00 : f32
    %50 = vector.broadcast %cst_37 : f32 to vector<8x768xf32>
    %51 = arith.maximumf %49, %50 : vector<8x768xf32>
    %52 = vector.broadcast %0 : vector<1x768xf32> to vector<8x768xf32>
    %53 = arith.mulf %51, %52 : vector<8x768xf32>
    %cst_38 = arith.constant 0.000000e+00 : f32
    %54 = vector.broadcast %cst_38 : f32 to vector<8x19xf32>
    %c0_39 = arith.constant 0 : index
    %c0_40 = arith.constant 0 : index
    %55 = vector.load %arg14[%c0_39, %c0_40] : memref<8x806xf32, #tpu.memory_space<vmem>>, vector<8x19xf32>
    tpu.vector_store %arg14[%c0_39, %c0_40], %54 {strides = array<i32>} : memref<8x806xf32, #tpu.memory_space<vmem>>, vector<8x19xf32>,
    %cst_41 = arith.constant 0.000000e+00 : f32
    %56 = vector.broadcast %cst_41 : f32 to vector<8x19xf32>
    %c0_42 = arith.constant 0 : index
    %c787 = arith.constant 787 : index
    %57 = vector.load %arg14[%c0_42, %c787] : memref<8x806xf32, #tpu.memory_space<vmem>>, vector<8x19xf32>
    tpu.vector_store %arg14[%c0_42, %c787], %56 {strides = array<i32>} : memref<8x806xf32, #tpu.memory_space<vmem>>, vector<8x19xf32>,
    %c0_43 = arith.constant 0 : index
    %c19_44 = arith.constant 19 : index
    %58 = vector.load %arg14[%c0_43, %c19_44] : memref<8x806xf32, #tpu.memory_space<vmem>>, vector<8x768xf32>
    tpu.vector_store %arg14[%c0_43, %c19_44], %53 {strides = array<i32>} : memref<8x806xf32, #tpu.memory_space<vmem>>, vector<8x768xf32>,
    %c0_45 = arith.constant 0 : index
    %c0_46 = arith.constant 0 : index
    %59 = vector.load %arg14[%c0_45, %c0_46] : memref<8x806xf32, #tpu.memory_space<vmem>>, vector<8x768xf32>
    %c0_47 = arith.constant 0 : index
    %c0_48 = arith.constant 0 : index
    %60 = vector.load %arg15[%c0_47, %c0_48] : memref<72x768xf32, #tpu.memory_space<vmem>>, vector<8x768xf32>
    tpu.vector_store %arg15[%c0_47, %c0_48], %59 {strides = array<i32>} : memref<72x768xf32, #tpu.memory_space<vmem>>, vector<8x768xf32>,
    %c0_49 = arith.constant 0 : index
    %c1_50 = arith.constant 1 : index
    %61 = vector.load %arg14[%c0_49, %c1_50] : memref<8x806xf32, #tpu.memory_space<vmem>>, vector<8x768xf32>
    %c8_51 = arith.constant 8 : index
    %c0_52 = arith.constant 0 : index
    %62 = vector.load %arg15[%c8_51, %c0_52] : memref<72x768xf32, #tpu.memory_space<vmem>>, vector<8x768xf32>
    tpu.vector_store %arg15[%c8_51, %c0_52], %61 {strides = array<i32>} : memref<72x768xf32, #tpu.memory_space<vmem>>, vector<8x768xf32>,
    %c0_53 = arith.constant 0 : index
    %c2_54 = arith.constant 2 : index
    %63 = vector.load %arg14[%c0_53, %c2_54] : memref<8x806xf32, #tpu.memory_space<vmem>>, vector<8x768xf32>
    %c16_55 = arith.constant 16 : index
    %c0_56 = arith.constant 0 : index
    %64 = vector.load %arg15[%c16_55, %c0_56] : memref<72x768xf32, #tpu.memory_space<vmem>>, vector<8x768xf32>
    tpu.vector_store %arg15[%c16_55, %c0_56], %63 {strides = array<i32>} : memref<72x768xf32, #tpu.memory_space<vmem>>, vector<8x768xf32>,
    %c0_57 = arith.constant 0 : index
    %c18_58 = arith.constant 18 : index
    %65 = vector.load %arg14[%c0_57, %c18_58] : memref<8x806xf32, #tpu.memory_space<vmem>>, vector<8x768xf32>
    %c24_59 = arith.constant 24 : index
    %c0_60 = arith.constant 0 : index
    %66 = vector.load %arg15[%c24_59, %c0_60] : memref<72x768xf32, #tpu.memory_space<vmem>>, vector<8x768xf32>
    tpu.vector_store %arg15[%c24_59, %c0_60], %65 {strides = array<i32>} : memref<72x768xf32, #tpu.memory_space<vmem>>, vector<8x768xf32>,
    %c0_61 = arith.constant 0 : index
    %c19_62 = arith.constant 19 : index
    %67 = vector.load %arg14[%c0_61, %c19_62] : memref<8x806xf32, #tpu.memory_space<vmem>>, vector<8x768xf32>
    %c32_63 = arith.constant 32 : index
    %c0_64 = arith.constant 0 : index
    %68 = vector.load %arg15[%c32_63, %c0_64] : memref<72x768xf32, #tpu.memory_space<vmem>>, vector<8x768xf32>
    tpu.vector_store %arg15[%c32_63, %c0_64], %67 {strides = array<i32>} : memref<72x768xf32, #tpu.memory_space<vmem>>, vector<8x768xf32>,
    %c0_65 = arith.constant 0 : index
    %c20_66 = arith.constant 20 : index
    %69 = vector.load %arg14[%c0_65, %c20_66] : memref<8x806xf32, #tpu.memory_space<vmem>>, vector<8x768xf32>
    %c40 = arith.constant 40 : index
    %c0_67 = arith.constant 0 : index
    %70 = vector.load %arg15[%c40, %c0_67] : memref<72x768xf32, #tpu.memory_space<vmem>>, vector<8x768xf32>
    tpu.vector_store %arg15[%c40, %c0_67], %69 {strides = array<i32>} : memref<72x768xf32, #tpu.memory_space<vmem>>, vector<8x768xf32>,
    %c0_68 = arith.constant 0 : index
    %c36_69 = arith.constant 36 : index
    %71 = vector.load %arg14[%c0_68, %c36_69] : memref<8x806xf32, #tpu.memory_space<vmem>>, vector<8x768xf32>
    %c48 = arith.constant 48 : index
    %c0_70 = arith.constant 0 : index
    %72 = vector.load %arg15[%c48, %c0_70] : memref<72x768xf32, #tpu.memory_space<vmem>>, vector<8x768xf32>
    tpu.vector_store %arg15[%c48, %c0_70], %71 {strides = array<i32>} : memref<72x768xf32, #tpu.memory_space<vmem>>, vector<8x768xf32>,
    %c0_71 = arith.constant 0 : index
    %c37_72 = arith.constant 37 : index
    %73 = vector.load %arg14[%c0_71, %c37_72] : memref<8x806xf32, #tpu.memory_space<vmem>>, vector<8x768xf32>
    %c56 = arith.constant 56 : index
    %c0_73 = arith.constant 0 : index
    %74 = vector.load %arg15[%c56, %c0_73] : memref<72x768xf32, #tpu.memory_space<vmem>>, vector<8x768xf32>
    tpu.vector_store %arg15[%c56, %c0_73], %73 {strides = array<i32>} : memref<72x768xf32, #tpu.memory_space<vmem>>, vector<8x768xf32>,
    %c0_74 = arith.constant 0 : index
    %c38_75 = arith.constant 38 : index
    %75 = vector.load %arg14[%c0_74, %c38_75] : memref<8x806xf32, #tpu.memory_space<vmem>>, vector<8x768xf32>
    %c64 = arith.constant 64 : index
    %c0_76 = arith.constant 0 : index
    %76 = vector.load %arg15[%c64, %c0_76] : memref<72x768xf32, #tpu.memory_space<vmem>>, vector<8x768xf32>
    tpu.vector_store %arg15[%c64, %c0_76], %75 {strides = array<i32>} : memref<72x768xf32, #tpu.memory_space<vmem>>, vector<8x768xf32>,
    %c0_77 = arith.constant 0 : index
    %c0_78 = arith.constant 0 : index
    %77 = vector.load %arg7[%c0_77, %c0_78] : memref<8x72xf32, #tpu.memory_space<vmem>>, vector<8x72xf32>
    %c0_79 = arith.constant 0 : index
    %c0_80 = arith.constant 0 : index
    %78 = vector.load %arg15[%c0_79, %c0_80] : memref<72x768xf32, #tpu.memory_space<vmem>>, vector<72x768xf32>
    %cst_81 = arith.constant dense<0.000000e+00> : vector<8x768xf32>
    %79 = tpu.matmul %77, %78, %cst_81 {dimension_numbers = #tpu.dot_dimension_numbers<[1], [0], [0], [1], [0, 0, 1, 1], [], []>} : vector<8x72xf32>, vector<72x768xf32>, vector<8x768xf32> -> vector<8x768xf32>
    %c0_82 = arith.constant 0 : index
    %c0_83 = arith.constant 0 : index
    %80 = vector.load %arg8[%c0_82, %c0_83] : memref<8x1xf32, #tpu.memory_space<vmem>>, vector<8x1xf32>
    %81 = vector.broadcast %80 : vector<8x1xf32> to vector<8x768xf32>
    %82 = arith.addf %79, %81 : vector<8x768xf32>
    %c0_84 = arith.constant 0 : index
    %c0_85 = arith.constant 0 : index
    %83 = vector.load %arg9[%c0_84, %c0_85] : memref<8x1xf32, #tpu.memory_space<vmem>>, vector<8x1xf32>
    %c0_86 = arith.constant 0 : index
    %c0_87 = arith.constant 0 : index
    %84 = vector.load %arg10[%c0_86, %c0_87] : memref<8x1xf32, #tpu.memory_space<vmem>>, vector<8x1xf32>
    %85 = vector.broadcast %0 : vector<1x768xf32> to vector<8x768xf32>
    %86 = arith.mulf %82, %85 : vector<8x768xf32>
    %cst_88 = arith.constant dense<0.000000e+00> : vector<8xf32>
    %87 = vector.multi_reduction <add>, %86, %cst_88 [1] : vector<8x768xf32> to vector<8xf32>
    %88 = vector.shape_cast %87 : vector<8xf32> to vector<8x1xf32>
    %89 = arith.mulf %86, %86 : vector<8x768xf32>
    %cst_89 = arith.constant dense<0.000000e+00> : vector<8xf32>
    %90 = vector.multi_reduction <add>, %89, %cst_89 [1] : vector<8x768xf32> to vector<8xf32>
    %91 = vector.shape_cast %90 : vector<8xf32> to vector<8x1xf32>
    %cst_90 = arith.constant 0.001953125 : f32
    %92 = vector.broadcast %cst_90 : f32 to vector<8x1xf32>
    %93 = arith.mulf %88, %92 : vector<8x1xf32>
    %cst_91 = arith.constant 0.001953125 : f32
    %94 = vector.broadcast %cst_91 : f32 to vector<8x1xf32>
    %95 = arith.mulf %91, %94 : vector<8x1xf32>
    %96 = arith.mulf %93, %93 : vector<8x1xf32>
    %97 = arith.subf %95, %96 : vector<8x1xf32>
    %cst_92 = arith.constant 9.99999974E-6 : f32
    %98 = vector.broadcast %cst_92 : f32 to vector<8x1xf32>
    %99 = arith.addf %97, %98 : vector<8x1xf32>
    %100 = math.rsqrt %99 : vector<8x1xf32>
    %101 = arith.mulf %83, %100 : vector<8x1xf32>
    %102 = arith.mulf %93, %101 : vector<8x1xf32>
    %103 = arith.subf %84, %102 : vector<8x1xf32>
    %104 = vector.broadcast %101 : vector<8x1xf32> to vector<8x768xf32>
    %105 = arith.mulf %82, %104 : vector<8x768xf32>
    %106 = vector.broadcast %103 : vector<8x1xf32> to vector<8x768xf32>
    %107 = arith.addf %105, %106 : vector<8x768xf32>
    %c0_93 = arith.constant 0 : index
    %c0_94 = arith.constant 0 : index
    %108 = vector.load %arg11[%c0_93, %c0_94] : memref<8x4xf32, #tpu.memory_space<vmem>>, vector<8x4xf32>
    %c0_95 = arith.constant 0 : index
    %c0_96 = arith.constant 0 : index
    %109 = vector.load %arg1[%c0_95, %c0_96] : memref<4x768xf32, #tpu.memory_space<vmem>>, vector<4x768xf32>
    %cst_97 = arith.constant dense<0.000000e+00> : vector<8x768xf32>
    %110 = tpu.matmul %108, %109, %cst_97 {dimension_numbers = #tpu.dot_dimension_numbers<[1], [0], [0], [1], [0, 0, 1, 1], [], []>} : vector<8x4xf32>, vector<4x768xf32>, vector<8x768xf32> -> vector<8x768xf32>
    %c0_98 = arith.constant 0 : index
    %c0_99 = arith.constant 0 : index
    %111 = vector.load %arg12[%c0_98, %c0_99] : memref<8x1xf32, #tpu.memory_space<vmem>>, vector<8x1xf32>
    %112 = vector.broadcast %111 : vector<8x1xf32> to vector<8x768xf32>
    %113 = arith.addf %110, %112 : vector<8x768xf32>
    %114 = arith.addf %107, %113 : vector<8x768xf32>
    %cst_100 = arith.constant 0.000000e+00 : f32
    %115 = vector.broadcast %cst_100 : f32 to vector<8x768xf32>
    %116 = arith.maximumf %114, %115 : vector<8x768xf32>
    %c0_101 = arith.constant 0 : index
    %c0_102 = arith.constant 0 : index
    %117 = vector.load %arg13[%c0_101, %c0_102] : memref<8x768xf32, #tpu.memory_space<vmem>>, vector<8x768xf32>
    tpu.vector_store %arg13[%c0_101, %c0_102], %116 {strides = array<i32>} : memref<8x768xf32, #tpu.memory_space<vmem>>, vector<8x768xf32>,
    return
  }
}

</mosaic_0001>

<llo_original>
// kernel: tpu_custom_call.1
$region0: #{tpu_custom_call.1}
  #allocation0 [shape = 'u32[]', space=smem, size = 0x4, offset = 0x4, fixed_abs, tag = 'smem constant byte address 0x4 - core index']
  #allocation1 [shape = 'u32[144,128]{1,0:T(1,128)}', space=vmem, size = 0x12000, scoped, tag = 'internal scratch']
  #allocation2 [shape = 'f32[8,806]{1,0:T(8,128)}', space=vmem, size = 0x7000, scoped, tag = 'scratch operand']
  #allocation3 [shape = 'f32[72,768]{1,0:T(8,128)}', space=vmem, size = 0x36000, scoped, tag = 'scratch operand']
  %s0 = inlined_call_operand.vmem [shape: f32[4,806], index: 0, kind: input, shape index: {}]
  %s1 = inlined_call_operand.vmem [shape: f32[4,768], index: 1, kind: input, shape index: {}]
  %s2 = inlined_call_operand.vmem [shape: f32[1,768], index: 2, kind: input, shape index: {}]
  %s3 = inlined_call_operand.vmem [shape: f32[8,36], index: 3, kind: input, shape index: {}]
  %s4 = inlined_call_operand.vmem [shape: f32[8,1], index: 4, kind: input, shape index: {}]
  %s5 = inlined_call_operand.vmem [shape: f32[8,1], index: 5, kind: input, shape index: {}]
  %s6 = inlined_call_operand.vmem [shape: f32[8,1], index: 6, kind: input, shape index: {}]
  %s7 = inlined_call_operand.vmem [shape: f32[8,72], index: 7, kind: input, shape index: {}]
  %s8 = inlined_call_operand.vmem [shape: f32[8,1], index: 8, kind: input, shape index: {}]
  %s9 = inlined_call_operand.vmem [shape: f32[8,1], index: 9, kind: input, shape index: {}]
  %s10 = inlined_call_operand.vmem [shape: f32[8,1], index: 10, kind: input, shape index: {}]
  %s11 = inlined_call_operand.vmem [shape: f32[8,4], index: 11, kind: input, shape index: {}]
  %s12 = inlined_call_operand.vmem [shape: f32[8,1], index: 12, kind: input, shape index: {}]
  %s13 = inlined_call_operand.hbm [shape: f32[8,768], index: 13, kind: output, shape index: {}]
  %s14 = sld [smem:[#allocation0]]
  $region62: #{tpu_custom_call.1} parent=0
    _
  %s16 = ssub.s32 1, %s14
  %s17 = scalar_select 0, %s16, %s14
  $region1: #{tpu_custom_call.1} parent=0
    #allocation4 [shape = 'u8[24576]{0}', space=vmem, size = 0x6000, scoped, tag = 'output window, operand 0, single buffered']
    #allocation5 [shape = 's32[1]{0}', space=sflag, size = 0x4, scoped, tag = 'scoped memory for tpu_custom_call.1']
    %18 = vsyncpa [#allocation5], 0
    // Predicated region
    $region2: #{tpu_custom_call.1} parent=1 // pred_check
      _
    $region3: #{tpu_custom_call.1} parent=1 // pred_check_branch
      %20 = sbr.rel (0) target = $region5
    $region4: #{tpu_custom_call.1} parent=1 // pred_region
      _
    $region5: #{tpu_custom_call.1} parent=1 // pred_fallthru
      _
    // Predicated region
    $region6: #{tpu_custom_call.1} parent=1 // pred_check
      _
    $region7: #{tpu_custom_call.1} parent=1 // pred_check_branch
      %22 = sbr.rel (0) target = $region9
    $region8: #{tpu_custom_call.1} parent=1 // pred_region
      _
    $region9: #{tpu_custom_call.1} parent=1 // pred_fallthru
      _
    // Predicated region
    $region10: #{tpu_custom_call.1} parent=1 // pred_check
      _
    $region11: #{tpu_custom_call.1} parent=1 // pred_check_branch
      %24 = sbr.rel (0) target = $region13
    $region12: #{tpu_custom_call.1} parent=1 // pred_region
      _
    $region13: #{tpu_custom_call.1} parent=1 // pred_fallthru
      _
    // Predicated region
    $region14: #{tpu_custom_call.1} parent=1 // pred_check
      _
    $region15: #{tpu_custom_call.1} parent=1 // pred_check_branch
      %26 = sbr.rel (0) target = $region17
    $region16: #{tpu_custom_call.1} parent=1 // pred_region
      _
    $region17: #{tpu_custom_call.1} parent=1 // pred_fallthru
      _
    // Predicated region
    $region18: #{tpu_custom_call.1} parent=1 // pred_check
      _
    $region19: #{tpu_custom_call.1} parent=1 // pred_check_branch
      %28 = sbr.rel (0) target = $region21
    $region20: #{tpu_custom_call.1} parent=1 // pred_region
      _
    $region21: #{tpu_custom_call.1} parent=1 // pred_fallthru
      _
    // Predicated region
    $region22: #{tpu_custom_call.1} parent=1 // pred_check
      _
    $region23: #{tpu_custom_call.1} parent=1 // pred_check_branch
      %30 = sbr.rel (0) target = $region25
    $region24: #{tpu_custom_call.1} parent=1 // pred_region
      _
    $region25: #{tpu_custom_call.1} parent=1 // pred_fallthru
      _
    // Predicated region
    $region26: #{tpu_custom_call.1} parent=1 // pred_check
      _
    $region27: #{tpu_custom_call.1} parent=1 // pred_check_branch
      %32 = sbr.rel (0) target = $region29
    $region28: #{tpu_custom_call.1} parent=1 // pred_region
      _
    $region29: #{tpu_custom_call.1} parent=1 // pred_fallthru
      _
    // Predicated region
    $region30: #{tpu_custom_call.1} parent=1 // pred_check
      _
    $region31: #{tpu_custom_call.1} parent=1 // pred_check_branch
      %34 = sbr.rel (0) target = $region33
    $region32: #{tpu_custom_call.1} parent=1 // pred_region
      _
    $region33: #{tpu_custom_call.1} parent=1 // pred_fallthru
      _
    // Predicated region
    $region34: #{tpu_custom_call.1} parent=1 // pred_check
      _
    $region35: #{tpu_custom_call.1} parent=1 // pred_check_branch
      %36 = sbr.rel (0) target = $region37
    $region36: #{tpu_custom_call.1} parent=1 // pred_region
      _
    $region37: #{tpu_custom_call.1} parent=1 // pred_fallthru
      _
    // Predicated region
    $region38: #{tpu_custom_call.1} parent=1 // pred_check
      _
    $region39: #{tpu_custom_call.1} parent=1 // pred_check_branch
      %38 = sbr.rel (0) target = $region41
    $region40: #{tpu_custom_call.1} parent=1 // pred_region
      _
    $region41: #{tpu_custom_call.1} parent=1 // pred_fallthru
      _
    // Predicated region
    $region42: #{tpu_custom_call.1} parent=1 // pred_check
      _
    $region43: #{tpu_custom_call.1} parent=1 // pred_check_branch
      %40 = sbr.rel (0) target = $region45
    $region44: #{tpu_custom_call.1} parent=1 // pred_region
      _
    $region45: #{tpu_custom_call.1} parent=1 // pred_fallthru
      _
    // Predicated region
    $region46: #{tpu_custom_call.1} parent=1 // pred_check
      _
    $region47: #{tpu_custom_call.1} parent=1 // pred_check_branch
      %42 = sbr.rel (0) target = $region49
    $region48: #{tpu_custom_call.1} parent=1 // pred_region
      _
    $region49: #{tpu_custom_call.1} parent=1 // pred_fallthru
      _
    // Predicated region
    $region50: #{tpu_custom_call.1} parent=1 // pred_check
      _
    $region51: #{tpu_custom_call.1} parent=1 // pred_check_branch
      %44 = sbr.rel (0) target = $region53
    $region52: #{tpu_custom_call.1} parent=1 // pred_region
      _
    $region53: #{tpu_custom_call.1} parent=1 // pred_fallthru
      _
    %v45 = vld [vmem:[%s2] sm:$0x3f]
    %v46 = vld [vmem:[%s0] sm:$0xff]
    %v47 = vld [vmem:[%s0 + $0x8] sm:$0xff]
    %v48 = vld [vmem:[%s0 + $0x10] sm:$0xff]
    %v52 = vcombine.high %v46, %v46
    %v53 = vcombine.high %v47, %v47
    %v54 = vcombine.high %v48, %v48
    %58 = vst [vmem:[#allocation3] sm:$0xf] %v46
    %59 = vst [vmem:[#allocation3 + $0x8] sm:$0xf] %v52
    %60 = vst [vmem:[#allocation3 + $0x10] sm:$0xf] %v47
    %61 = vst [vmem:[#allocation3 + $0x18] sm:$0xf] %v53
    %62 = vst [vmem:[#allocation3 + $0x20] sm:$0xf] %v48
    %63 = vst [vmem:[#allocation3 + $0x28] sm:$0xf] %v54
    %v64 = vld [vmem:[%s0] sm:$0xff]
    %v65 = vld [vmem:[%s0 + $0x8] sm:$0xff]
    %v66 = vld [vmem:[%s0 + $0x10] sm:$0xff]
    %v67 = vld [vmem:[%s0 + $0x18] sm:$0xf]
    %v72 = vcombine.low %v64, %v64
    %v73 = vcombine.low %v65, %v65
    %v74 = vcombine.low %v66, %v66
    %v75 = vcombine.low %v67, %v67
    %76 = vrot.lane.b32.xlu0 %v72, 127
    %v77 = vpop.permute.xlu0 %76
    %78 = vrot.lane.b32.xlu0 %v64, 127
    %v79 = vpop.permute.xlu0 %78
    %80 = vrot.lane.b32.xlu0 %v73, 127
    %v81 = vpop.permute.xlu0 %80
    %82 = vrot.lane.b32.xlu0 %v65, 127
    %v83 = vpop.permute.xlu0 %82
    %84 = vrot.lane.b32.xlu0 %v74, 127
    %v85 = vpop.permute.xlu0 %84
    %86 = vrot.lane.b32.xlu0 %v66, 127
    %v87 = vpop.permute.xlu0 %86
    %88 = vrot.lane.b32.xlu0 %v75, 127
    %v89 = vpop.permute.xlu0 %88
    %vm90 = vcmask 1039360
    %v91 = vsel %vm90, %v77, %v79
    %v92 = vsel %vm90, %v79, %v81
    %v93 = vsel %vm90, %v81, %v83
    %v94 = vsel %vm90, %v83, %v85
    %v95 = vsel %vm90, %v85, %v87
    %v96 = vsel %vm90, %v87, %v89
    %103 = vst [vmem:[#allocation3] sm:$0xf0] %v91
    %104 = vst [vmem:[#allocation3 + $0x8] sm:$0xf0] %v92
    %105 = vst [vmem:[#allocation3 + $0x10] sm:$0xf0] %v93
    %106 = vst [vmem:[#allocation3 + $0x18] sm:$0xf0] %v94
    %107 = vst [vmem:[#allocation3 + $0x20] sm:$0xf0] %v95
    %108 = vst [vmem:[#allocation3 + $0x28] sm:$0xf0] %v96
    %v109 = vld [vmem:[%s0] sm:$0xff]
    %v110 = vld [vmem:[%s0 + $0x8] sm:$0xff]
    %v111 = vld [vmem:[%s0 + $0x10] sm:$0xff]
    %v112 = vld [vmem:[%s0 + $0x18] sm:$0xf]
    %v117 = vcombine.high %v109, %v109
    %v118 = vcombine.high %v110, %v110
    %v119 = vcombine.high %v111, %v111
    %120 = vrot.lane.b32.xlu0 %v109, 126
    %v121 = vpop.permute.xlu0 %120
    %122 = vrot.lane.b32.xlu0 %v117, 126
    %v123 = vpop.permute.xlu0 %122
    %124 = vrot.lane.b32.xlu0 %v110, 126
    %v125 = vpop.permute.xlu0 %124
    %126 = vrot.lane.b32.xlu0 %v118, 126
    %v127 = vpop.permute.xlu0 %126
    %128 = vrot.lane.b32.xlu0 %v111, 126
    %v129 = vpop.permute.xlu0 %128
    %130 = vrot.lane.b32.xlu0 %v119, 126
    %v131 = vpop.permute.xlu0 %130
    %132 = vrot.lane.b32.xlu0 %v112, 126
    %v133 = vpop.permute.xlu0 %132
    %vm134 = vcmask 1031168
    %v135 = vsel %vm134, %v121, %v123
    %v136 = vsel %vm134, %v123, %v125
    %v137 = vsel %vm134, %v125, %v127
    %v138 = vsel %vm134, %v127, %v129
    %v139 = vsel %vm134, %v129, %v131
    %v140 = vsel %vm134, %v131, %v133
    %147 = vst [vmem:[#allocation3 + $0x30] sm:$0xf] %v135
    %148 = vst [vmem:[#allocation3 + $0x38] sm:$0xf] %v136
    %149 = vst [vmem:[#allocation3 + $0x40] sm:$0xf] %v137
    %150 = vst [vmem:[#allocation3 + $0x48] sm:$0xf] %v138
    %151 = vst [vmem:[#allocation3 + $0x50] sm:$0xf] %v139
    %152 = vst [vmem:[#allocation3 + $0x58] sm:$0xf] %v140
    %v153 = vld [vmem:[%s0] sm:$0xff]
    %v154 = vld [vmem:[%s0 + $0x8] sm:$0xff]
    %v155 = vld [vmem:[%s0 + $0x10] sm:$0xff]
    %v156 = vld [vmem:[%s0 + $0x18] sm:$0xf]
    %v161 = vcombine.low %v153, %v153
    %v162 = vcombine.low %v154, %v154
    %v163 = vcombine.low %v155, %v155
    %v164 = vcombine.low %v156, %v156
    %165 = vrot.lane.b32.xlu0 %v161, 110
    %v166 = vpop.permute.xlu0 %165
    %167 = vrot.lane.b32.xlu0 %v153, 110
    %v168 = vpop.permute.xlu0 %167
    %169 = vrot.lane.b32.xlu0 %v162, 110
    %v170 = vpop.permute.xlu0 %169
    %171 = vrot.lane.b32.xlu0 %v154, 110
    %v172 = vpop.permute.xlu0 %171
    %173 = vrot.lane.b32.xlu0 %v163, 110
    %v174 = vpop.permute.xlu0 %173
    %175 = vrot.lane.b32.xlu0 %v155, 110
    %v176 = vpop.permute.xlu0 %175
    %177 = vrot.lane.b32.xlu0 %v164, 110
    %v178 = vpop.permute.xlu0 %177
    %vm179 = vcmask 900096
    %v180 = vsel %vm179, %v166, %v168
    %v181 = vsel %vm179, %v168, %v170
    %v182 = vsel %vm179, %v170, %v172
    %v183 = vsel %vm179, %v172, %v174
    %v184 = vsel %vm179, %v174, %v176
    %v185 = vsel %vm179, %v176, %v178
    %192 = vst [vmem:[#allocation3 + $0x30] sm:$0xf0] %v180
    %193 = vst [vmem:[#allocation3 + $0x38] sm:$0xf0] %v181
    %194 = vst [vmem:[#allocation3 + $0x40] sm:$0xf0] %v182
    %195 = vst [vmem:[#allocation3 + $0x48] sm:$0xf0] %v183
    %196 = vst [vmem:[#allocation3 + $0x50] sm:$0xf0] %v184
    %197 = vst [vmem:[#allocation3 + $0x58] sm:$0xf0] %v185
    %v198 = vld [vmem:[%s0] sm:$0xff]
    %v199 = vld [vmem:[%s0 + $0x8] sm:$0xff]
    %v200 = vld [vmem:[%s0 + $0x10] sm:$0xff]
    %v201 = vld [vmem:[%s0 + $0x18] sm:$0xf]
    %v206 = vcombine.high %v198, %v198
    %v207 = vcombine.high %v199, %v199
    %v208 = vcombine.high %v200, %v200
    %209 = vrot.lane.b32.xlu0 %v198, 109
    %v210 = vpop.permute.xlu0 %209
    %211 = vrot.lane.b32.xlu0 %v206, 109
    %v212 = vpop.permute.xlu0 %211
    %213 = vrot.lane.b32.xlu0 %v199, 109
    %v214 = vpop.permute.xlu0 %213
    %215 = vrot.lane.b32.xlu0 %v207, 109
    %v216 = vpop.permute.xlu0 %215
    %217 = vrot.lane.b32.xlu0 %v200, 109
    %v218 = vpop.permute.xlu0 %217
    %219 = vrot.lane.b32.xlu0 %v208, 109
    %v220 = vpop.permute.xlu0 %219
    %221 = vrot.lane.b32.xlu0 %v201, 109
    %v222 = vpop.permute.xlu0 %221
    %vm223 = vcmask 891904
    %v224 = vsel %vm223, %v210, %v212
    %v225 = vsel %vm223, %v212, %v214
    %v226 = vsel %vm223, %v214, %v216
    %v227 = vsel %vm223, %v216, %v218
    %v228 = vsel %vm223, %v218, %v220
    %v229 = vsel %vm223, %v220, %v222
    %236 = vst [vmem:[#allocation3 + $0x60] sm:$0xf] %v224
    %237 = vst [vmem:[#allocation3 + $0x68] sm:$0xf] %v225
    %238 = vst [vmem:[#allocation3 + $0x70] sm:$0xf] %v226
    %239 = vst [vmem:[#allocation3 + $0x78] sm:$0xf] %v227
    %240 = vst [vmem:[#allocation3 + $0x80] sm:$0xf] %v228
    %241 = vst [vmem:[#allocation3 + $0x88] sm:$0xf] %v229
    %v242 = vld [vmem:[%s0] sm:$0xff]
    %v243 = vld [vmem:[%s0 + $0x8] sm:$0xff]
    %v244 = vld [vmem:[%s0 + $0x10] sm:$0xff]
    %v245 = vld [vmem:[%s0 + $0x18] sm:$0xf]
    %v250 = vcombine.low %v242, %v242
    %v251 = vcombine.low %v243, %v243
    %v252 = vcombine.low %v244, %v244
    %v253 = vcombine.low %v245, %v245
    %254 = vrot.lane.b32.xlu0 %v250, 108
    %v255 = vpop.permute.xlu0 %254
    %256 = vrot.lane.b32.xlu0 %v242, 108
    %v257 = vpop.permute.xlu0 %256
    %258 = vrot.lane.b32.xlu0 %v251, 108
    %v259 = vpop.permute.xlu0 %258
    %260 = vrot.lane.b32.xlu0 %v243, 108
    %v261 = vpop.permute.xlu0 %260
    %262 = vrot.lane.b32.xlu0 %v252, 108
    %v263 = vpop.permute.xlu0 %262
    %264 = vrot.lane.b32.xlu0 %v244, 108
    %v265 = vpop.permute.xlu0 %264
    %266 = vrot.lane.b32.xlu0 %v253, 108
    %v267 = vpop.permute.xlu0 %266
    %vm268 = vcmask 883712
    %v269 = vsel %vm268, %v255, %v257
    %v270 = vsel %vm268, %v257, %v259
    %v271 = vsel %vm268, %v259, %v261
    %v272 = vsel %vm268, %v261, %v263
    %v273 = vsel %vm268, %v263, %v265
    %v274 = vsel %vm268, %v265, %v267
    %281 = vst [vmem:[#allocation3 + $0x60] sm:$0xf0] %v269
    %282 = vst [vmem:[#allocation3 + $0x68] sm:$0xf0] %v270
    %283 = vst [vmem:[#allocation3 + $0x70] sm:$0xf0] %v271
    %284 = vst [vmem:[#allocation3 + $0x78] sm:$0xf0] %v272
    %285 = vst [vmem:[#allocation3 + $0x80] sm:$0xf0] %v273
    %286 = vst [vmem:[#allocation3 + $0x88] sm:$0xf0] %v274
    %v287 = vld [vmem:[%s0] sm:$0xff]
    %v288 = vld [vmem:[%s0 + $0x8] sm:$0xff]
    %v289 = vld [vmem:[%s0 + $0x10] sm:$0xff]
    %v290 = vld [vmem:[%s0 + $0x18] sm:$0xf]
    %v295 = vcombine.high %v287, %v287
    %v296 = vcombine.high %v288, %v288
    %v297 = vcombine.high %v289, %v289
    %298 = vrot.lane.b32.xlu0 %v287, 92
    %v299 = vpop.permute.xlu0 %298
    %300 = vrot.lane.b32.xlu0 %v295, 92
    %v301 = vpop.permute.xlu0 %300
    %302 = vrot.lane.b32.xlu0 %v288, 92
    %v303 = vpop.permute.xlu0 %302
    %304 = vrot.lane.b32.xlu0 %v296, 92
    %v305 = vpop.permute.xlu0 %304
    %306 = vrot.lane.b32.xlu0 %v289, 92
    %v307 = vpop.permute.xlu0 %306
    %308 = vrot.lane.b32.xlu0 %v297, 92
    %v309 = vpop.permute.xlu0 %308
    %310 = vrot.lane.b32.xlu0 %v290, 92
    %v311 = vpop.permute.xlu0 %310
    %vm312 = vcmask 752640
    %v313 = vsel %vm312, %v299, %v301
    %v314 = vsel %vm312, %v301, %v303
    %v315 = vsel %vm312, %v303, %v305
    %v316 = vsel %vm312, %v305, %v307
    %v317 = vsel %vm312, %v307, %v309
    %v318 = vsel %vm312, %v309, %v311
    %325 = vst [vmem:[#allocation3 + $0x90] sm:$0xf] %v313
    %326 = vst [vmem:[#allocation3 + $0x98] sm:$0xf] %v314
    %327 = vst [vmem:[#allocation3 + $0xa0] sm:$0xf] %v315
    %328 = vst [vmem:[#allocation3 + $0xa8] sm:$0xf] %v316
    %329 = vst [vmem:[#allocation3 + $0xb0] sm:$0xf] %v317
    %330 = vst [vmem:[#allocation3 + $0xb8] sm:$0xf] %v318
    %v331 = vld [vmem:[%s0] sm:$0xff]
    %v332 = vld [vmem:[%s0 + $0x8] sm:$0xff]
    %v333 = vld [vmem:[%s0 + $0x10] sm:$0xff]
    %v334 = vld [vmem:[%s0 + $0x18] sm:$0xf]
    %v339 = vcombine.low %v331, %v331
    %v340 = vcombine.low %v332, %v332
    %v341 = vcombine.low %v333, %v333
    %v342 = vcombine.low %v334, %v334
    %343 = vrot.lane.b32.xlu0 %v339, 91
    %v344 = vpop.permute.xlu0 %343
    %345 = vrot.lane.b32.xlu0 %v331, 91
    %v346 = vpop.permute.xlu0 %345
    %347 = vrot.lane.b32.xlu0 %v340, 91
    %v348 = vpop.permute.xlu0 %347
    %349 = vrot.lane.b32.xlu0 %v332, 91
    %v350 = vpop.permute.xlu0 %349
    %351 = vrot.lane.b32.xlu0 %v341, 91
    %v352 = vpop.permute.xlu0 %351
    %353 = vrot.lane.b32.xlu0 %v333, 91
    %v354 = vpop.permute.xlu0 %353
    %355 = vrot.lane.b32.xlu0 %v342, 91
    %v356 = vpop.permute.xlu0 %355
    %vm357 = vcmask 744448
    %v358 = vsel %vm357, %v344, %v346
    %v359 = vsel %vm357, %v346, %v348
    %v360 = vsel %vm357, %v348, %v350
    %v361 = vsel %vm357, %v350, %v352
    %v362 = vsel %vm357, %v352, %v354
    %v363 = vsel %vm357, %v354, %v356
    %370 = vst [vmem:[#allocation3 + $0x90] sm:$0xf0] %v358
    %371 = vst [vmem:[#allocation3 + $0x98] sm:$0xf0] %v359
    %372 = vst [vmem:[#allocation3 + $0xa0] sm:$0xf0] %v360
    %373 = vst [vmem:[#allocation3 + $0xa8] sm:$0xf0] %v361
    %374 = vst [vmem:[#allocation3 + $0xb0] sm:$0xf0] %v362
    %375 = vst [vmem:[#allocation3 + $0xb8] sm:$0xf0] %v363
    %v376 = vld [vmem:[%s0] sm:$0xff]
    %v377 = vld [vmem:[%s0 + $0x8] sm:$0xff]
    %v378 = vld [vmem:[%s0 + $0x10] sm:$0xff]
    %v379 = vld [vmem:[%s0 + $0x18] sm:$0xf]
    %v384 = vcombine.high %v376, %v376
    %v385 = vcombine.high %v377, %v377
    %v386 = vcombine.high %v378, %v378
    %387 = vrot.lane.b32.xlu0 %v376, 90
    %v388 = vpop.permute.xlu0 %387
    %389 = vrot.lane.b32.xlu0 %v384, 90
    %v390 = vpop.permute.xlu0 %389
    %391 = vrot.lane.b32.xlu0 %v377, 90
    %v392 = vpop.permute.xlu0 %391
    %393 = vrot.lane.b32.xlu0 %v385, 90
    %v394 = vpop.permute.xlu0 %393
    %395 = vrot.lane.b32.xlu0 %v378, 90
    %v396 = vpop.permute.xlu0 %395
    %397 = vrot.lane.b32.xlu0 %v386, 90
    %v398 = vpop.permute.xlu0 %397
    %399 = vrot.lane.b32.xlu0 %v379, 90
    %v400 = vpop.permute.xlu0 %399
    %vm401 = vcmask 736256
    %v402 = vsel %vm401, %v388, %v390
    %v403 = vsel %vm401, %v390, %v392
    %v404 = vsel %vm401, %v392, %v394
    %v405 = vsel %vm401, %v394, %v396
    %v406 = vsel %vm401, %v396, %v398
    %v407 = vsel %vm401, %v398, %v400
    %414 = vst [vmem:[#allocation3 + $0xc0] sm:$0xf] %v402
    %415 = vst [vmem:[#allocation3 + $0xc8] sm:$0xf] %v403
    %416 = vst [vmem:[#allocation3 + $0xd0] sm:$0xf] %v404
    %417 = vst [vmem:[#allocation3 + $0xd8] sm:$0xf] %v405
    %418 = vst [vmem:[#allocation3 + $0xe0] sm:$0xf] %v406
    %419 = vst [vmem:[#allocation3 + $0xe8] sm:$0xf] %v407
    %v420 = vld [vmem:[%s3] sm:$0xff]
    %v421 = vld [vmem:[#allocation3] sm:$0xff]
    %v422 = vld [vmem:[#allocation3 + $0x8] sm:$0xff]
    %v423 = vld [vmem:[#allocation3 + $0x10] sm:$0xff]
    %v424 = vld [vmem:[#allocation3 + $0x18] sm:$0xff]
    %v425 = vld [vmem:[#allocation3 + $0x20] sm:$0xff]
    %v426 = vld [vmem:[#allocation3 + $0x28] sm:$0xff]
    %v427 = vld [vmem:[#allocation3 + $0x30] sm:$0xff]
    %v428 = vld [vmem:[#allocation3 + $0x38] sm:$0xff]
    %v429 = vld [vmem:[#allocation3 + $0x40] sm:$0xff]
    %v430 = vld [vmem:[#allocation3 + $0x48] sm:$0xff]
    %v431 = vld [vmem:[#allocation3 + $0x50] sm:$0xff]
    %v432 = vld [vmem:[#allocation3 + $0x58] sm:$0xff]
    %v433 = vld [vmem:[#allocation3 + $0x60] sm:$0xff]
    %v434 = vld [vmem:[#allocation3 + $0x68] sm:$0xff]
    %v435 = vld [vmem:[#allocation3 + $0x70] sm:$0xff]
    %v436 = vld [vmem:[#allocation3 + $0x78] sm:$0xff]
    %v437 = vld [vmem:[#allocation3 + $0x80] sm:$0xff]
    %v438 = vld [vmem:[#allocation3 + $0x88] sm:$0xff]
    %v439 = vld [vmem:[#allocation3 + $0x90] sm:$0xff]
    %v440 = vld [vmem:[#allocation3 + $0x98] sm:$0xff]
    %v441 = vld [vmem:[#allocation3 + $0xa0] sm:$0xff]
    %v442 = vld [vmem:[#allocation3 + $0xa8] sm:$0xff]
    %v443 = vld [vmem:[#allocation3 + $0xb0] sm:$0xff]
    %v444 = vld [vmem:[#allocation3 + $0xb8] sm:$0xff]
    %v445 = vld [vmem:[#allocation3 + $0xc0] sm:$0xf]
    %v446 = vld [vmem:[#allocation3 + $0xc8] sm:$0xf]
    %v447 = vld [vmem:[#allocation3 + $0xd0] sm:$0xf]
    %v448 = vld [vmem:[#allocation3 + $0xd8] sm:$0xf]
    %v449 = vld [vmem:[#allocation3 + $0xe0] sm:$0xf]
    %v450 = vld [vmem:[#allocation3 + $0xe8] sm:$0xf]
    %v451 = vld [vmem:[%s4] sm:$0xff]
    %453 = vset.pattern.permute.xlu0 0
    %454 = vperm.xlu0 %453, %v451
    %v455 = vpop.permute.xlu0 %454
    %vm457 = vcmask 293888
    %v459 = vsel %vm457, %v420, 0
    %vm461 = vcmask 1043456
    %v463 = vsel %vm461, %v445, 0
    %v466 = vsel %vm461, %v446, 0
    %v469 = vsel %vm461, %v447, 0
    %v472 = vsel %vm461, %v448, 0
    %v475 = vsel %vm461, %v449, 0
    %v478 = vsel %vm461, %v450, 0
    %480 = vmatprep.subr.mxu0 %v422
    %481 = vmatpush1.msra.mxu0 %v421
    %482 = vmatprep.subr.mxu0 %v428
    %483 = vmatpush1.msra.mxu0 %v427
    %484 = vmatprep.subr.mxu0 %v434
    %485 = vmatpush1.msra.mxu0 %v433
    %486 = vmatprep.subr.mxu0 %v440
    %487 = vmatpush1.msra.mxu0 %v439
    %488 = vmatprep.subr.mxu0 %v466
    %489 = vmatpush1.msra.mxu0 %v463
    %490 = vmatprep.subr.mxu0 0.0
    %491 = vmatpush1.msra.mxu0 0.0
    %492 = vmatprep.subr.mxu0 0.0
    %493 = vmatpush1.msra.mxu0 0.0
    %494 = vmatprep.subr.mxu0 0.0
    %495 = vmatpush1.msra.mxu0 0.0
    %496 = vmatprep.subr.mxu0 0.0
    %497 = vmatpush1.msra.mxu0 0.0
    %498 = vmatprep.subr.mxu0 0.0
    %499 = vmatpush1.msra.mxu0 0.0
    %500 = vmatprep.subr.mxu0 0.0
    %501 = vmatpush1.msra.mxu0 0.0
    %502 = vmatprep.subr.mxu0 0.0
    %503 = vmatpush1.msra.mxu0 0.0
    %504 = vmatprep.subr.mxu0 0.0
    %505 = vmatpush1.msra.mxu0 0.0
    %506 = vmatprep.subr.mxu0 0.0
    %507 = vmatpush1.msra.mxu0 0.0
    %508 = vmatprep.subr.mxu0 0.0
    %509 = vmatpush1.msra.mxu0 0.0
    %510 = vmatprep.subr.mxu0 0.0
    %511 = vmatpush1.msra.mxu0 0.0
    %512 = vmatprep.subr.mxu0 0.0
    %513 = vmatpush1.msra.mxu0 0.0
    %514 = vmatprep.subr.mxu0 0.0
    %515 = vmatpush1.msra.mxu0 0.0
    %516 = vmatprep.subr.mxu0 0.0
    %517 = vmatpush1.msra.mxu0 0.0
    %518 = vmatprep.subr.mxu0 0.0
    %519 = vmatpush1.msra.mxu0 0.0
    %520 = vmatprep.subr.mxu0 0.0
    %521 = vmatpush1.msra.mxu0 0.0
    %522 = vmatprep.subr.mxu0 0.0
    %523 = vmatpush1.msra.mxu0 0.0
    %524 = vmatprep.subr.mxu0 0.0
    %525 = vmatpush1.msra.mxu0 0.0
    %526 = vmatprep.subr.mxu0 0.0
    %527 = vmatpush1.msra.mxu0 0.0
    %528 = vmatprep.subr.mxu0 0.0
    %529 = vmatpush1.msra.mxu0 0.0
    %530 = vmatprep.subr.mxu0 0.0
    %531 = vmatpush1.msra.mxu0 0.0
    %532 = vmatprep.subr.mxu0 0.0
    %533 = vmatpush1.msra.mxu0 0.0
    %534 = vmatprep.subr.mxu0 0.0
    %535 = vmatpush1.msra.mxu0 0.0
    %536 = vmatprep.subr.mxu0 0.0
    %537 = vmatpush1.msra.mxu0 0.0
    %538 = vmatprep.subr.mxu0 0.0
    %539 = vmatpush1.msra.mxu0 0.0
    %540 = vmatprep.subr.mxu0 0.0
    %541 = vmatpush1.msra.mxu0 0.0
    %542 = vmatprep.subr.mxu0 0.0
    %543 = vmatpush1.msra.mxu0 0.0
    %544 = vmatprep.mubr.f32.mxu0 0.0
    %545 = vmatmul.mubr.f32.gmra.mrb[0].mxu0 %v459
    %v546 = vpop.f32.mrb[0].mxu0
    %v547 = vadd.f32 %v455, %v546
    %v548 = vpop.f32.mrb[0].mxu0
    %v549 = vadd.f32 %v455, %v548
    %550 = vdwg.mxu0
    %551 = vmatprep.subr.mxu0 %v424
    %552 = vmatpush1.msra.mxu0 %v423
    %553 = vmatprep.subr.mxu0 %v430
    %554 = vmatpush1.msra.mxu0 %v429
    %555 = vmatprep.subr.mxu0 %v436
    %556 = vmatpush1.msra.mxu0 %v435
    %557 = vmatprep.subr.mxu0 %v442
    %558 = vmatpush1.msra.mxu0 %v441
    %559 = vmatprep.subr.mxu0 %v472
    %560 = vmatpush1.msra.mxu0 %v469
    %561 = vmatprep.subr.mxu0 0.0
    %562 = vmatpush1.msra.mxu0 0.0
    %563 = vmatprep.subr.mxu0 0.0
    %564 = vmatpush1.msra.mxu0 0.0
    %565 = vmatprep.subr.mxu0 0.0
    %566 = vmatpush1.msra.mxu0 0.0
    %567 = vmatprep.subr.mxu0 0.0
    %568 = vmatpush1.msra.mxu0 0.0
    %569 = vmatprep.subr.mxu0 0.0
    %570 = vmatpush1.msra.mxu0 0.0
    %571 = vmatprep.subr.mxu0 0.0
    %572 = vmatpush1.msra.mxu0 0.0
    %573 = vmatprep.subr.mxu0 0.0
    %574 = vmatpush1.msra.mxu0 0.0
    %575 = vmatprep.subr.mxu0 0.0
    %576 = vmatpush1.msra.mxu0 0.0
    %577 = vmatprep.subr.mxu0 0.0
    %578 = vmatpush1.msra.mxu0 0.0
    %579 = vmatprep.subr.mxu0 0.0
    %580 = vmatpush1.msra.mxu0 0.0
    %581 = vmatprep.subr.mxu0 0.0
    %582 = vmatpush1.msra.mxu0 0.0
    %583 = vmatprep.subr.mxu0 0.0
    %584 = vmatpush1.msra.mxu0 0.0
    %585 = vmatprep.subr.mxu0 0.0
    %586 = vmatpush1.msra.mxu0 0.0
    %587 = vmatprep.subr.mxu0 0.0
    %588 = vmatpush1.msra.mxu0 0.0
    %589 = vmatprep.subr.mxu0 0.0
    %590 = vmatpush1.msra.mxu0 0.0
    %591 = vmatprep.subr.mxu0 0.0
    %592 = vmatpush1.msra.mxu0 0.0
    %593 = vmatprep.subr.mxu0 0.0
    %594 = vmatpush1.msra.mxu0 0.0
    %595 = vmatprep.subr.mxu0 0.0
    %596 = vmatpush1.msra.mxu0 0.0
    %597 = vmatprep.subr.mxu0 0.0
    %598 = vmatpush1.msra.mxu0 0.0
    %599 = vmatprep.subr.mxu0 0.0
    %600 = vmatpush1.msra.mxu0 0.0
    %601 = vmatprep.subr.mxu0 0.0
    %602 = vmatpush1.msra.mxu0 0.0
    %603 = vmatprep.subr.mxu0 0.0
    %604 = vmatpush1.msra.mxu0 0.0
    %605 = vmatprep.subr.mxu0 0.0
    %606 = vmatpush1.msra.mxu0 0.0
    %607 = vmatprep.subr.mxu0 0.0
    %608 = vmatpush1.msra.mxu0 0.0
    %609 = vmatprep.subr.mxu0 0.0
    %610 = vmatpush1.msra.mxu0 0.0
    %611 = vmatprep.subr.mxu0 0.0
    %612 = vmatpush1.msra.mxu0 0.0
    %613 = vmatprep.subr.mxu0 0.0
    %614 = vmatpush1.msra.mxu0 0.0
    %615 = vmatprep.mubr.f32.mxu0 0.0
    %616 = vmatmul.mubr.f32.gmra.mrb[0].mxu0 %v459
    %v617 = vpop.f32.mrb[0].mxu0
    %v618 = vadd.f32 %v455, %v617
    %v619 = vpop.f32.mrb[0].mxu0
    %v620 = vadd.f32 %v455, %v619
    %621 = vdwg.mxu0
    %622 = vmatprep.subr.mxu0 %v426
    %623 = vmatpush1.msra.mxu0 %v425
    %624 = vmatprep.subr.mxu0 %v432
    %625 = vmatpush1.msra.mxu0 %v431
    %626 = vmatprep.subr.mxu0 %v438
    %627 = vmatpush1.msra.mxu0 %v437
    %628 = vmatprep.subr.mxu0 %v444
    %629 = vmatpush1.msra.mxu0 %v443
    %630 = vmatprep.subr.mxu0 %v478
    %631 = vmatpush1.msra.mxu0 %v475
    %632 = vmatprep.subr.mxu0 0.0
    %633 = vmatpush1.msra.mxu0 0.0
    %634 = vmatprep.subr.mxu0 0.0
    %635 = vmatpush1.msra.mxu0 0.0
    %636 = vmatprep.subr.mxu0 0.0
    %637 = vmatpush1.msra.mxu0 0.0
    %638 = vmatprep.subr.mxu0 0.0
    %639 = vmatpush1.msra.mxu0 0.0
    %640 = vmatprep.subr.mxu0 0.0
    %641 = vmatpush1.msra.mxu0 0.0
    %642 = vmatprep.subr.mxu0 0.0
    %643 = vmatpush1.msra.mxu0 0.0
    %644 = vmatprep.subr.mxu0 0.0
    %645 = vmatpush1.msra.mxu0 0.0
    %646 = vmatprep.subr.mxu0 0.0
    %647 = vmatpush1.msra.mxu0 0.0
    %648 = vmatprep.subr.mxu0 0.0
    %649 = vmatpush1.msra.mxu0 0.0
    %650 = vmatprep.subr.mxu0 0.0
    %651 = vmatpush1.msra.mxu0 0.0
    %652 = vmatprep.subr.mxu0 0.0
    %653 = vmatpush1.msra.mxu0 0.0
    %654 = vmatprep.subr.mxu0 0.0
    %655 = vmatpush1.msra.mxu0 0.0
    %656 = vmatprep.subr.mxu0 0.0
    %657 = vmatpush1.msra.mxu0 0.0
    %658 = vmatprep.subr.mxu0 0.0
    %659 = vmatpush1.msra.mxu0 0.0
    %660 = vmatprep.subr.mxu0 0.0
    %661 = vmatpush1.msra.mxu0 0.0
    %662 = vmatprep.subr.mxu0 0.0
    %663 = vmatpush1.msra.mxu0 0.0
    %664 = vmatprep.subr.mxu0 0.0
    %665 = vmatpush1.msra.mxu0 0.0
    %666 = vmatprep.subr.mxu0 0.0
    %667 = vmatpush1.msra.mxu0 0.0
    %668 = vmatprep.subr.mxu0 0.0
    %669 = vmatpush1.msra.mxu0 0.0
    %670 = vmatprep.subr.mxu0 0.0
    %671 = vmatpush1.msra.mxu0 0.0
    %672 = vmatprep.subr.mxu0 0.0
    %673 = vmatpush1.msra.mxu0 0.0
    %674 = vmatprep.subr.mxu0 0.0
    %675 = vmatpush1.msra.mxu0 0.0
    %676 = vmatprep.subr.mxu0 0.0
    %677 = vmatpush1.msra.mxu0 0.0
    %678 = vmatprep.subr.mxu0 0.0
    %679 = vmatpush1.msra.mxu0 0.0
    %680 = vmatprep.subr.mxu0 0.0
    %681 = vmatpush1.msra.mxu0 0.0
    %682 = vmatprep.subr.mxu0 0.0
    %683 = vmatpush1.msra.mxu0 0.0
    %684 = vmatprep.subr.mxu0 0.0
    %685 = vmatpush1.msra.mxu0 0.0
    %686 = vmatprep.mubr.f32.mxu0 0.0
    %687 = vmatmul.mubr.f32.gmra.mrb[0].mxu0 %v459
    %v688 = vpop.f32.mrb[0].mxu0
    %v689 = vadd.f32 %v455, %v688
    %v690 = vpop.f32.mrb[0].mxu0
    %v691 = vadd.f32 %v455, %v690
    %692 = vdwg.mxu0
    %v693 = vld [vmem:[%s5] sm:$0xff]
    %v694 = vld [vmem:[%s6] sm:$0xff]
    %v696 = vlaneseq
    %v697 = vshrl.u32 %v696, 7
    %v698 = vsub.s32 0, %v697
    %v699 = vrot.slane %v45, %v698
    %v700 = vlaneseq
    %v701 = vshrl.u32 %v700, 7
    %v702 = vsub.s32 1, %v701
    %v703 = vrot.slane %v45, %v702
    %v704 = vlaneseq
    %v705 = vshrl.u32 %v704, 7
    %v706 = vsub.s32 2, %v705
    %v707 = vrot.slane %v45, %v706
    %v708 = vlaneseq
    %v709 = vshrl.u32 %v708, 7
    %v710 = vsub.s32 3, %v709
    %v711 = vrot.slane %v45, %v710
    %v712 = vlaneseq
    %v713 = vshrl.u32 %v712, 7
    %v714 = vsub.s32 4, %v713
    %v715 = vrot.slane %v45, %v714
    %v716 = vlaneseq
    %v717 = vshrl.u32 %v716, 7
    %v718 = vsub.s32 5, %v717
    %v719 = vrot.slane %v45, %v718
    %v726 = vmul.f32 %v547, %v699
    %v727 = vmul.f32 %v549, %v703
    %v728 = vmul.f32 %v618, %v707
    %v729 = vmul.f32 %v620, %v711
    %v730 = vmul.f32 %v689, %v715
    %v731 = vmul.f32 %v691, %v719
    %v732 = vadd.f32 %v726, %v727
    %v733 = vadd.f32 %v732, %v728
    %v734 = vadd.f32 %v733, %v729
    %v735 = vadd.f32 %v734, %v730
    %v736 = vadd.f32 %v735, %v731
    %737 = vadd.xlane.f32.xlu0 %v736
    %v738 = vpop.xlane.xlu0 %737
    %v739 = vmul.f32 %v726, %v726
    %v740 = vmul.f32 %v727, %v727
    %v741 = vmul.f32 %v728, %v728
    %v742 = vmul.f32 %v729, %v729
    %v743 = vmul.f32 %v730, %v730
    %v744 = vmul.f32 %v731, %v731
    %v745 = vadd.f32 %v739, %v740
    %v746 = vadd.f32 %v745, %v741
    %v747 = vadd.f32 %v746, %v742
    %v748 = vadd.f32 %v747, %v743
    %v749 = vadd.f32 %v748, %v744
    %750 = vadd.xlane.f32.xlu0 %v749
    %v751 = vpop.xlane.xlu0 %750
    %v752 = vmul.f32 %v738, 0.001953125
    %v753 = vmul.f32 %v751, 0.001953125
    %v754 = vmul.f32 %v752, %v752
    %v755 = vsub.f32 %v753, %v754
    %v756 = vadd.f32 %v755, 1e-05
    %v757 = vrsqrt.pop %v756
    %v758 = vmul.f32 %v693, %v757
    %v759 = vmul.f32 %v752, %v758
    %v760 = vsub.f32 %v694, %v759
    %762 = vset.pattern.permute.xlu0 0
    %763 = vperm.xlu0 %762, %v758
    %v764 = vpop.permute.xlu0 %763
    %v766 = vmul.f32 %v547, %v764
    %v767 = vmul.f32 %v549, %v764
    %v768 = vmul.f32 %v618, %v764
    %v769 = vmul.f32 %v620, %v764
    %v770 = vmul.f32 %v689, %v764
    %v771 = vmul.f32 %v691, %v764
    %773 = vset.pattern.permute.xlu0 0
    %774 = vperm.xlu0 %773, %v760
    %v775 = vpop.permute.xlu0 %774
    %v777 = vadd.f32 %v766, %v775
    %v778 = vadd.f32 %v767, %v775
    %v779 = vadd.f32 %v768, %v775
    %v780 = vadd.f32 %v769, %v775
    %v781 = vadd.f32 %v770, %v775
    %v782 = vadd.f32 %v771, %v775
    %v783 = vmax.f32 %v777, 0.0
    %v784 = vmax.f32 %v778, 0.0
    %v785 = vmax.f32 %v779, 0.0
    %v786 = vmax.f32 %v780, 0.0
    %v787 = vmax.f32 %v781, 0.0
    %v788 = vmax.f32 %v782, 0.0
    %v789 = vmul.f32 %v783, %v699
    %v790 = vmul.f32 %v784, %v703
    %v791 = vmul.f32 %v785, %v707
    %v792 = vmul.f32 %v786, %v711
    %v793 = vmul.f32 %v787, %v715
    %v794 = vmul.f32 %v788, %v719
    %vm795 = vcmask 154624
    %796 = vst.msk [vmem:[#allocation2] sm:$0xff] %vm795, 0.0
    %vm797 = vcmask 310424
    %798 = vst.msk [vmem:[#allocation2 + $0x30] sm:$0xff] %vm797, 0.0
    %805 = vrot.lane.b32.xlu0 %v789, 19
    %v806 = vpop.permute.xlu0 %805
    %807 = vrot.lane.b32.xlu0 %v790, 19
    %v808 = vpop.permute.xlu0 %807
    %809 = vrot.lane.b32.xlu0 %v791, 19
    %v810 = vpop.permute.xlu0 %809
    %811 = vrot.lane.b32.xlu0 %v792, 19
    %v812 = vpop.permute.xlu0 %811
    %813 = vrot.lane.b32.xlu0 %v793, 19
    %v814 = vpop.permute.xlu0 %813
    %815 = vrot.lane.b32.xlu0 %v794, 19
    %v816 = vpop.permute.xlu0 %815
    %v817 = vsel %vm795, %v806, %v808
    %v818 = vsel %vm795, %v808, %v810
    %v819 = vsel %vm795, %v810, %v812
    %v820 = vsel %vm795, %v812, %v814
    %v821 = vsel %vm795, %v814, %v816
    %vm829 = vcmask 1047704
    %830 = vst.msk [vmem:[#allocation2] sm:$0xff] %vm829, %v806
    %831 = vst [vmem:[#allocation2 + $0x8] sm:$0xff] %v817
    %832 = vst [vmem:[#allocation2 + $0x10] sm:$0xff] %v818
    %833 = vst [vmem:[#allocation2 + $0x18] sm:$0xff] %v819
    %834 = vst [vmem:[#allocation2 + $0x20] sm:$0xff] %v820
    %835 = vst [vmem:[#allocation2 + $0x28] sm:$0xff] %v821
    %836 = vst.msk [vmem:[#allocation2 + $0x30] sm:$0xff] %vm795, %v816
    %v837 = vld [vmem:[#allocation2] sm:$0xff]
    %v838 = vld [vmem:[#allocation2 + $0x8] sm:$0xff]
    %v839 = vld [vmem:[#allocation2 + $0x10] sm:$0xff]
    %v840 = vld [vmem:[#allocation2 + $0x18] sm:$0xff]
    %v841 = vld [vmem:[#allocation2 + $0x20] sm:$0xff]
    %v842 = vld [vmem:[#allocation2 + $0x28] sm:$0xff]
    %843 = vst [vmem:[#allocation3] sm:$0xff] %v837
    %844 = vst [vmem:[#allocation3 + $0x8] sm:$0xff] %v838
    %845 = vst [vmem:[#allocation3 + $0x10] sm:$0xff] %v839
    %846 = vst [vmem:[#allocation3 + $0x18] sm:$0xff] %v840
    %847 = vst [vmem:[#allocation3 + $0x20] sm:$0xff] %v841
    %848 = vst [vmem:[#allocation3 + $0x28] sm:$0xff] %v842
    %v849 = vld [vmem:[#allocation2] sm:$0xff]
    %v850 = vld [vmem:[#allocation2 + $0x8] sm:$0xff]
    %v851 = vld [vmem:[#allocation2 + $0x10] sm:$0xff]
    %v852 = vld [vmem:[#allocation2 + $0x18] sm:$0xff]
    %v853 = vld [vmem:[#allocation2 + $0x20] sm:$0xff]
    %v854 = vld [vmem:[#allocation2 + $0x28] sm:$0xff]
    %v855 = vld [vmem:[#allocation2 + $0x30] sm:$0xff]
    %863 = vrot.lane.b32.xlu0 %v849, 127
    %v864 = vpop.permute.xlu0 %863
    %865 = vrot.lane.b32.xlu0 %v850, 127
    %v866 = vpop.permute.xlu0 %865
    %867 = vrot.lane.b32.xlu0 %v851, 127
    %v868 = vpop.permute.xlu0 %867
    %869 = vrot.lane.b32.xlu0 %v852, 127
    %v870 = vpop.permute.xlu0 %869
    %871 = vrot.lane.b32.xlu0 %v853, 127
    %v872 = vpop.permute.xlu0 %871
    %873 = vrot.lane.b32.xlu0 %v854, 127
    %v874 = vpop.permute.xlu0 %873
    %875 = vrot.lane.b32.xlu0 %v855, 127
    %v876 = vpop.permute.xlu0 %875
    %v877 = vsel %vm90, %v864, %v866
    %v878 = vsel %vm90, %v866, %v868
    %v879 = vsel %vm90, %v868, %v870
    %v880 = vsel %vm90, %v870, %v872
    %v881 = vsel %vm90, %v872, %v874
    %v882 = vsel %vm90, %v874, %v876
    %889 = vst [vmem:[#allocation3 + $0x30] sm:$0xff] %v877
    %890 = vst [vmem:[#allocation3 + $0x38] sm:$0xff] %v878
    %891 = vst [vmem:[#allocation3 + $0x40] sm:$0xff] %v879
    %892 = vst [vmem:[#allocation3 + $0x48] sm:$0xff] %v880
    %893 = vst [vmem:[#allocation3 + $0x50] sm:$0xff] %v881
    %894 = vst [vmem:[#allocation3 + $0x58] sm:$0xff] %v882
    %v895 = vld [vmem:[#allocation2] sm:$0xff]
    %v896 = vld [vmem:[#allocation2 + $0x8] sm:$0xff]
    %v897 = vld [vmem:[#allocation2 + $0x10] sm:$0xff]
    %v898 = vld [vmem:[#allocation2 + $0x18] sm:$0xff]
    %v899 = vld [vmem:[#allocation2 + $0x20] sm:$0xff]
    %v900 = vld [vmem:[#allocation2 + $0x28] sm:$0xff]
    %v901 = vld [vmem:[#allocation2 + $0x30] sm:$0xff]
    %909 = vrot.lane.b32.xlu0 %v895, 126
    %v910 = vpop.permute.xlu0 %909
    %911 = vrot.lane.b32.xlu0 %v896, 126
    %v912 = vpop.permute.xlu0 %911
    %913 = vrot.lane.b32.xlu0 %v897, 126
    %v914 = vpop.permute.xlu0 %913
    %915 = vrot.lane.b32.xlu0 %v898, 126
    %v916 = vpop.permute.xlu0 %915
    %917 = vrot.lane.b32.xlu0 %v899, 126
    %v918 = vpop.permute.xlu0 %917
    %919 = vrot.lane.b32.xlu0 %v900, 126
    %v920 = vpop.permute.xlu0 %919
    %921 = vrot.lane.b32.xlu0 %v901, 126
    %v922 = vpop.permute.xlu0 %921
    %v923 = vsel %vm134, %v910, %v912
    %v924 = vsel %vm134, %v912, %v914
    %v925 = vsel %vm134, %v914, %v916
    %v926 = vsel %vm134, %v916, %v918
    %v927 = vsel %vm134, %v918, %v920
    %v928 = vsel %vm134, %v920, %v922
    %935 = vst [vmem:[#allocation3 + $0x60] sm:$0xff] %v923
    %936 = vst [vmem:[#allocation3 + $0x68] sm:$0xff] %v924
    %937 = vst [vmem:[#allocation3 + $0x70] sm:$0xff] %v925
    %938 = vst [vmem:[#allocation3 + $0x78] sm:$0xff] %v926
    %939 = vst [vmem:[#allocation3 + $0x80] sm:$0xff] %v927
    %940 = vst [vmem:[#allocation3 + $0x88] sm:$0xff] %v928
    %v941 = vld [vmem:[#allocation2] sm:$0xff]
    %v942 = vld [vmem:[#allocation2 + $0x8] sm:$0xff]
    %v943 = vld [vmem:[#allocation2 + $0x10] sm:$0xff]
    %v944 = vld [vmem:[#allocation2 + $0x18] sm:$0xff]
    %v945 = vld [vmem:[#allocation2 + $0x20] sm:$0xff]
    %v946 = vld [vmem:[#allocation2 + $0x28] sm:$0xff]
    %v947 = vld [vmem:[#allocation2 + $0x30] sm:$0xff]
    %955 = vrot.lane.b32.xlu0 %v941, 110
    %v956 = vpop.permute.xlu0 %955
    %957 = vrot.lane.b32.xlu0 %v942, 110
    %v958 = vpop.permute.xlu0 %957
    %959 = vrot.lane.b32.xlu0 %v943, 110
    %v960 = vpop.permute.xlu0 %959
    %961 = vrot.lane.b32.xlu0 %v944, 110
    %v962 = vpop.permute.xlu0 %961
    %963 = vrot.lane.b32.xlu0 %v945, 110
    %v964 = vpop.permute.xlu0 %963
    %965 = vrot.lane.b32.xlu0 %v946, 110
    %v966 = vpop.permute.xlu0 %965
    %967 = vrot.lane.b32.xlu0 %v947, 110
    %v968 = vpop.permute.xlu0 %967
    %v969 = vsel %vm179, %v956, %v958
    %v970 = vsel %vm179, %v958, %v960
    %v971 = vsel %vm179, %v960, %v962
    %v972 = vsel %vm179, %v962, %v964
    %v973 = vsel %vm179, %v964, %v966
    %v974 = vsel %vm179, %v966, %v968
    %981 = vst [vmem:[#allocation3 + $0x90] sm:$0xff] %v969
    %982 = vst [vmem:[#allocation3 + $0x98] sm:$0xff] %v970
    %983 = vst [vmem:[#allocation3 + $0xa0] sm:$0xff] %v971
    %984 = vst [vmem:[#allocation3 + $0xa8] sm:$0xff] %v972
    %985 = vst [vmem:[#allocation3 + $0xb0] sm:$0xff] %v973
    %986 = vst [vmem:[#allocation3 + $0xb8] sm:$0xff] %v974
    %v987 = vld [vmem:[#allocation2] sm:$0xff]
    %v988 = vld [vmem:[#allocation2 + $0x8] sm:$0xff]
    %v989 = vld [vmem:[#allocation2 + $0x10] sm:$0xff]
    %v990 = vld [vmem:[#allocation2 + $0x18] sm:$0xff]
    %v991 = vld [vmem:[#allocation2 + $0x20] sm:$0xff]
    %v992 = vld [vmem:[#allocation2 + $0x28] sm:$0xff]
    %v993 = vld [vmem:[#allocation2 + $0x30] sm:$0xff]
    %1001 = vrot.lane.b32.xlu0 %v987, 109
    %v1002 = vpop.permute.xlu0 %1001
    %1003 = vrot.lane.b32.xlu0 %v988, 109
    %v1004 = vpop.permute.xlu0 %1003
    %1005 = vrot.lane.b32.xlu0 %v989, 109
    %v1006 = vpop.permute.xlu0 %1005
    %1007 = vrot.lane.b32.xlu0 %v990, 109
    %v1008 = vpop.permute.xlu0 %1007
    %1009 = vrot.lane.b32.xlu0 %v991, 109
    %v1010 = vpop.permute.xlu0 %1009
    %1011 = vrot.lane.b32.xlu0 %v992, 109
    %v1012 = vpop.permute.xlu0 %1011
    %1013 = vrot.lane.b32.xlu0 %v993, 109
    %v1014 = vpop.permute.xlu0 %1013
    %v1015 = vsel %vm223, %v1002, %v1004
    %v1016 = vsel %vm223, %v1004, %v1006
    %v1017 = vsel %vm223, %v1006, %v1008
    %v1018 = vsel %vm223, %v1008, %v1010
    %v1019 = vsel %vm223, %v1010, %v1012
    %v1020 = vsel %vm223, %v1012, %v1014
    %1027 = vst [vmem:[#allocation3 + $0xc0] sm:$0xff] %v1015
    %1028 = vst [vmem:[#allocation3 + $0xc8] sm:$0xff] %v1016
    %1029 = vst [vmem:[#allocation3 + $0xd0] sm:$0xff] %v1017
    %1030 = vst [vmem:[#allocation3 + $0xd8] sm:$0xff] %v1018
    %1031 = vst [vmem:[#allocation3 + $0xe0] sm:$0xff] %v1019
    %1032 = vst [vmem:[#allocation3 + $0xe8] sm:$0xff] %v1020
    %v1033 = vld [vmem:[#allocation2] sm:$0xff]
    %v1034 = vld [vmem:[#allocation2 + $0x8] sm:$0xff]
    %v1035 = vld [vmem:[#allocation2 + $0x10] sm:$0xff]
    %v1036 = vld [vmem:[#allocation2 + $0x18] sm:$0xff]
    %v1037 = vld [vmem:[#allocation2 + $0x20] sm:$0xff]
    %v1038 = vld [vmem:[#allocation2 + $0x28] sm:$0xff]
    %v1039 = vld [vmem:[#allocation2 + $0x30] sm:$0xff]
    %1047 = vrot.lane.b32.xlu0 %v1033, 108
    %v1048 = vpop.permute.xlu0 %1047
    %1049 = vrot.lane.b32.xlu0 %v1034, 108
    %v1050 = vpop.permute.xlu0 %1049
    %1051 = vrot.lane.b32.xlu0 %v1035, 108
    %v1052 = vpop.permute.xlu0 %1051
    %1053 = vrot.lane.b32.xlu0 %v1036, 108
    %v1054 = vpop.permute.xlu0 %1053
    %1055 = vrot.lane.b32.xlu0 %v1037, 108
    %v1056 = vpop.permute.xlu0 %1055
    %1057 = vrot.lane.b32.xlu0 %v1038, 108
    %v1058 = vpop.permute.xlu0 %1057
    %1059 = vrot.lane.b32.xlu0 %v1039, 108
    %v1060 = vpop.permute.xlu0 %1059
    %v1061 = vsel %vm268, %v1048, %v1050
    %v1062 = vsel %vm268, %v1050, %v1052
    %v1063 = vsel %vm268, %v1052, %v1054
    %v1064 = vsel %vm268, %v1054, %v1056
    %v1065 = vsel %vm268, %v1056, %v1058
    %v1066 = vsel %vm268, %v1058, %v1060
    %1073 = vst [vmem:[#allocation3 + $0xf0] sm:$0xff] %v1061
    %1074 = vst [vmem:[#allocation3 + $0xf8] sm:$0xff] %v1062
    %1075 = vst [vmem:[#allocation3 + $0x100] sm:$0xff] %v1063
    %1076 = vst [vmem:[#allocation3 + $0x108] sm:$0xff] %v1064
    %1077 = vst [vmem:[#allocation3 + $0x110] sm:$0xff] %v1065
    %1078 = vst [vmem:[#allocation3 + $0x118] sm:$0xff] %v1066
    %v1079 = vld [vmem:[#allocation2] sm:$0xff]
    %v1080 = vld [vmem:[#allocation2 + $0x8] sm:$0xff]
    %v1081 = vld [vmem:[#allocation2 + $0x10] sm:$0xff]
    %v1082 = vld [vmem:[#allocation2 + $0x18] sm:$0xff]
    %v1083 = vld [vmem:[#allocation2 + $0x20] sm:$0xff]
    %v1084 = vld [vmem:[#allocation2 + $0x28] sm:$0xff]
    %v1085 = vld [vmem:[#allocation2 + $0x30] sm:$0xff]
    %1093 = vrot.lane.b32.xlu0 %v1079, 92
    %v1094 = vpop.permute.xlu0 %1093
    %1095 = vrot.lane.b32.xlu0 %v1080, 92
    %v1096 = vpop.permute.xlu0 %1095
    %1097 = vrot.lane.b32.xlu0 %v1081, 92
    %v1098 = vpop.permute.xlu0 %1097
    %1099 = vrot.lane.b32.xlu0 %v1082, 92
    %v1100 = vpop.permute.xlu0 %1099
    %1101 = vrot.lane.b32.xlu0 %v1083, 92
    %v1102 = vpop.permute.xlu0 %1101
    %1103 = vrot.lane.b32.xlu0 %v1084, 92
    %v1104 = vpop.permute.xlu0 %1103
    %1105 = vrot.lane.b32.xlu0 %v1085, 92
    %v1106 = vpop.permute.xlu0 %1105
    %v1107 = vsel %vm312, %v1094, %v1096
    %v1108 = vsel %vm312, %v1096, %v1098
    %v1109 = vsel %vm312, %v1098, %v1100
    %v1110 = vsel %vm312, %v1100, %v1102
    %v1111 = vsel %vm312, %v1102, %v1104
    %v1112 = vsel %vm312, %v1104, %v1106
    %1119 = vst [vmem:[#allocation3 + $0x120] sm:$0xff] %v1107
    %1120 = vst [vmem:[#allocation3 + $0x128] sm:$0xff] %v1108
    %1121 = vst [vmem:[#allocation3 + $0x130] sm:$0xff] %v1109
    %1122 = vst [vmem:[#allocation3 + $0x138] sm:$0xff] %v1110
    %1123 = vst [vmem:[#allocation3 + $0x140] sm:$0xff] %v1111
    %1124 = vst [vmem:[#allocation3 + $0x148] sm:$0xff] %v1112
    %v1125 = vld [vmem:[#allocation2] sm:$0xff]
    %v1126 = vld [vmem:[#allocation2 + $0x8] sm:$0xff]
    %v1127 = vld [vmem:[#allocation2 + $0x10] sm:$0xff]
    %v1128 = vld [vmem:[#allocation2 + $0x18] sm:$0xff]
    %v1129 = vld [vmem:[#allocation2 + $0x20] sm:$0xff]
    %v1130 = vld [vmem:[#allocation2 + $0x28] sm:$0xff]
    %v1131 = vld [vmem:[#allocation2 + $0x30] sm:$0xff]
    %1139 = vrot.lane.b32.xlu0 %v1125, 91
    %v1140 = vpop.permute.xlu0 %1139
    %1141 = vrot.lane.b32.xlu0 %v1126, 91
    %v1142 = vpop.permute.xlu0 %1141
    %1143 = vrot.lane.b32.xlu0 %v1127, 91
    %v1144 = vpop.permute.xlu0 %1143
    %1145 = vrot.lane.b32.xlu0 %v1128, 91
    %v1146 = vpop.permute.xlu0 %1145
    %1147 = vrot.lane.b32.xlu0 %v1129, 91
    %v1148 = vpop.permute.xlu0 %1147
    %1149 = vrot.lane.b32.xlu0 %v1130, 91
    %v1150 = vpop.permute.xlu0 %1149
    %1151 = vrot.lane.b32.xlu0 %v1131, 91
    %v1152 = vpop.permute.xlu0 %1151
    %v1153 = vsel %vm357, %v1140, %v1142
    %v1154 = vsel %vm357, %v1142, %v1144
    %v1155 = vsel %vm357, %v1144, %v1146
    %v1156 = vsel %vm357, %v1146, %v1148
    %v1157 = vsel %vm357, %v1148, %v1150
    %v1158 = vsel %vm357, %v1150, %v1152
    %1165 = vst [vmem:[#allocation3 + $0x150] sm:$0xff] %v1153
    %1166 = vst [vmem:[#allocation3 + $0x158] sm:$0xff] %v1154
    %1167 = vst [vmem:[#allocation3 + $0x160] sm:$0xff] %v1155
    %1168 = vst [vmem:[#allocation3 + $0x168] sm:$0xff] %v1156
    %1169 = vst [vmem:[#allocation3 + $0x170] sm:$0xff] %v1157
    %1170 = vst [vmem:[#allocation3 + $0x178] sm:$0xff] %v1158
    %v1171 = vld [vmem:[#allocation2] sm:$0xff]
    %v1172 = vld [vmem:[#allocation2 + $0x8] sm:$0xff]
    %v1173 = vld [vmem:[#allocation2 + $0x10] sm:$0xff]
    %v1174 = vld [vmem:[#allocation2 + $0x18] sm:$0xff]
    %v1175 = vld [vmem:[#allocation2 + $0x20] sm:$0xff]
    %v1176 = vld [vmem:[#allocation2 + $0x28] sm:$0xff]
    %v1177 = vld [vmem:[#allocation2 + $0x30] sm:$0xff]
    %1185 = vrot.lane.b32.xlu0 %v1171, 90
    %v1186 = vpop.permute.xlu0 %1185
    %1187 = vrot.lane.b32.xlu0 %v1172, 90
    %v1188 = vpop.permute.xlu0 %1187
    %1189 = vrot.lane.b32.xlu0 %v1173, 90
    %v1190 = vpop.permute.xlu0 %1189
    %1191 = vrot.lane.b32.xlu0 %v1174, 90
    %v1192 = vpop.permute.xlu0 %1191
    %1193 = vrot.lane.b32.xlu0 %v1175, 90
    %v1194 = vpop.permute.xlu0 %1193
    %1195 = vrot.lane.b32.xlu0 %v1176, 90
    %v1196 = vpop.permute.xlu0 %1195
    %1197 = vrot.lane.b32.xlu0 %v1177, 90
    %v1198 = vpop.permute.xlu0 %1197
    %v1199 = vsel %vm401, %v1186, %v1188
    %v1200 = vsel %vm401, %v1188, %v1190
    %v1201 = vsel %vm401, %v1190, %v1192
    %v1202 = vsel %vm401, %v1192, %v1194
    %v1203 = vsel %vm401, %v1194, %v1196
    %v1204 = vsel %vm401, %v1196, %v1198
    %1211 = vst [vmem:[#allocation3 + $0x180] sm:$0xff] %v1199
    %1212 = vst [vmem:[#allocation3 + $0x188] sm:$0xff] %v1200
    %1213 = vst [vmem:[#allocation3 + $0x190] sm:$0xff] %v1201
    %1214 = vst [vmem:[#allocation3 + $0x198] sm:$0xff] %v1202
    %1215 = vst [vmem:[#allocation3 + $0x1a0] sm:$0xff] %v1203
    %1216 = vst [vmem:[#allocation3 + $0x1a8] sm:$0xff] %v1204
    %v1217 = vld [vmem:[%s7] sm:$0xff]
    %v1218 = vld [vmem:[#allocation3] sm:$0xff]
    %v1219 = vld [vmem:[#allocation3 + $0x8] sm:$0xff]
    %v1220 = vld [vmem:[#allocation3 + $0x10] sm:$0xff]
    %v1221 = vld [vmem:[#allocation3 + $0x18] sm:$0xff]
    %v1222 = vld [vmem:[#allocation3 + $0x20] sm:$0xff]
    %v1223 = vld [vmem:[#allocation3 + $0x28] sm:$0xff]
    %v1224 = vld [vmem:[#allocation3 + $0x30] sm:$0xff]
    %v1225 = vld [vmem:[#allocation3 + $0x38] sm:$0xff]
    %v1226 = vld [vmem:[#allocation3 + $0x40] sm:$0xff]
    %v1227 = vld [vmem:[#allocation3 + $0x48] sm:$0xff]
    %v1228 = vld [vmem:[#allocation3 + $0x50] sm:$0xff]
    %v1229 = vld [vmem:[#allocation3 + $0x58] sm:$0xff]
    %v1230 = vld [vmem:[#allocation3 + $0x60] sm:$0xff]
    %v1231 = vld [vmem:[#allocation3 + $0x68] sm:$0xff]
    %v1232 = vld [vmem:[#allocation3 + $0x70] sm:$0xff]
    %v1233 = vld [vmem:[#allocation3 + $0x78] sm:$0xff]
    %v1234 = vld [vmem:[#allocation3 + $0x80] sm:$0xff]
    %v1235 = vld [vmem:[#allocation3 + $0x88] sm:$0xff]
    %v1236 = vld [vmem:[#allocation3 + $0x90] sm:$0xff]
    %v1237 = vld [vmem:[#allocation3 + $0x98] sm:$0xff]
    %v1238 = vld [vmem:[#allocation3 + $0xa0] sm:$0xff]
    %v1239 = vld [vmem:[#allocation3 + $0xa8] sm:$0xff]
    %v1240 = vld [vmem:[#allocation3 + $0xb0] sm:$0xff]
    %v1241 = vld [vmem:[#allocation3 + $0xb8] sm:$0xff]
    %v1242 = vld [vmem:[#allocation3 + $0xc0] sm:$0xff]
    %v1243 = vld [vmem:[#allocation3 + $0xc8] sm:$0xff]
    %v1244 = vld [vmem:[#allocation3 + $0xd0] sm:$0xff]
    %v1245 = vld [vmem:[#allocation3 + $0xd8] sm:$0xff]
    %v1246 = vld [vmem:[#allocation3 + $0xe0] sm:$0xff]
    %v1247 = vld [vmem:[#allocation3 + $0xe8] sm:$0xff]
    %v1248 = vld [vmem:[#allocation3 + $0xf0] sm:$0xff]
    %v1249 = vld [vmem:[#allocation3 + $0xf8] sm:$0xff]
    %v1250 = vld [vmem:[#allocation3 + $0x100] sm:$0xff]
    %v1251 = vld [vmem:[#allocation3 + $0x108] sm:$0xff]
    %v1252 = vld [vmem:[#allocation3 + $0x110] sm:$0xff]
    %v1253 = vld [vmem:[#allocation3 + $0x118] sm:$0xff]
    %v1254 = vld [vmem:[#allocation3 + $0x120] sm:$0xff]
    %v1255 = vld [vmem:[#allocation3 + $0x128] sm:$0xff]
    %v1256 = vld [vmem:[#allocation3 + $0x130] sm:$0xff]
    %v1257 = vld [vmem:[#allocation3 + $0x138] sm:$0xff]
    %v1258 = vld [vmem:[#allocation3 + $0x140] sm:$0xff]
    %v1259 = vld [vmem:[#allocation3 + $0x148] sm:$0xff]
    %v1260 = vld [vmem:[#allocation3 + $0x150] sm:$0xff]
    %v1261 = vld [vmem:[#allocation3 + $0x158] sm:$0xff]
    %v1262 = vld [vmem:[#allocation3 + $0x160] sm:$0xff]
    %v1263 = vld [vmem:[#allocation3 + $0x168] sm:$0xff]
    %v1264 = vld [vmem:[#allocation3 + $0x170] sm:$0xff]
    %v1265 = vld [vmem:[#allocation3 + $0x178] sm:$0xff]
    %v1266 = vld [vmem:[#allocation3 + $0x180] sm:$0xff]
    %v1267 = vld [vmem:[#allocation3 + $0x188] sm:$0xff]
    %v1268 = vld [vmem:[#allocation3 + $0x190] sm:$0xff]
    %v1269 = vld [vmem:[#allocation3 + $0x198] sm:$0xff]
    %v1270 = vld [vmem:[#allocation3 + $0x1a0] sm:$0xff]
    %v1271 = vld [vmem:[#allocation3 + $0x1a8] sm:$0xff]
    %v1272 = vld [vmem:[%s8] sm:$0xff]
    %1274 = vset.pattern.permute.xlu0 0
    %1275 = vperm.xlu0 %1274, %v1272
    %v1276 = vpop.permute.xlu0 %1275
    %vm1278 = vcmask 588800
    %v1280 = vsel %vm1278, %v1217, 0
    %1282 = vmatprep.subr.mxu0 %v1219
    %1283 = vmatpush1.msra.mxu0 %v1218
    %1284 = vmatprep.subr.mxu0 %v1225
    %1285 = vmatpush1.msra.mxu0 %v1224
    %1286 = vmatprep.subr.mxu0 %v1231
    %1287 = vmatpush1.msra.mxu0 %v1230
    %1288 = vmatprep.subr.mxu0 %v1237
    %1289 = vmatpush1.msra.mxu0 %v1236
    %1290 = vmatprep.subr.mxu0 %v1243
    %1291 = vmatpush1.msra.mxu0 %v1242
    %1292 = vmatprep.subr.mxu0 %v1249
    %1293 = vmatpush1.msra.mxu0 %v1248
    %1294 = vmatprep.subr.mxu0 %v1255
    %1295 = vmatpush1.msra.mxu0 %v1254
    %1296 = vmatprep.subr.mxu0 %v1261
    %1297 = vmatpush1.msra.mxu0 %v1260
    %1298 = vmatprep.subr.mxu0 %v1267
    %1299 = vmatpush1.msra.mxu0 %v1266
    %1300 = vmatprep.subr.mxu0 0.0
    %1301 = vmatpush1.msra.mxu0 0.0
    %1302 = vmatprep.subr.mxu0 0.0
    %1303 = vmatpush1.msra.mxu0 0.0
    %1304 = vmatprep.subr.mxu0 0.0
    %1305 = vmatpush1.msra.mxu0 0.0
    %1306 = vmatprep.subr.mxu0 0.0
    %1307 = vmatpush1.msra.mxu0 0.0
    %1308 = vmatprep.subr.mxu0 0.0
    %1309 = vmatpush1.msra.mxu0 0.0
    %1310 = vmatprep.subr.mxu0 0.0
    %1311 = vmatpush1.msra.mxu0 0.0
    %1312 = vmatprep.subr.mxu0 0.0
    %1313 = vmatpush1.msra.mxu0 0.0
    %1314 = vmatprep.subr.mxu0 0.0
    %1315 = vmatpush1.msra.mxu0 0.0
    %1316 = vmatprep.subr.mxu0 0.0
    %1317 = vmatpush1.msra.mxu0 0.0
    %1318 = vmatprep.subr.mxu0 0.0
    %1319 = vmatpush1.msra.mxu0 0.0
    %1320 = vmatprep.subr.mxu0 0.0
    %1321 = vmatpush1.msra.mxu0 0.0
    %1322 = vmatprep.subr.mxu0 0.0
    %1323 = vmatpush1.msra.mxu0 0.0
    %1324 = vmatprep.subr.mxu0 0.0
    %1325 = vmatpush1.msra.mxu0 0.0
    %1326 = vmatprep.subr.mxu0 0.0
    %1327 = vmatpush1.msra.mxu0 0.0
    %1328 = vmatprep.subr.mxu0 0.0
    %1329 = vmatpush1.msra.mxu0 0.0
    %1330 = vmatprep.subr.mxu0 0.0
    %1331 = vmatpush1.msra.mxu0 0.0
    %1332 = vmatprep.subr.mxu0 0.0
    %1333 = vmatpush1.msra.mxu0 0.0
    %1334 = vmatprep.subr.mxu0 0.0
    %1335 = vmatpush1.msra.mxu0 0.0
    %1336 = vmatprep.subr.mxu0 0.0
    %1337 = vmatpush1.msra.mxu0 0.0
    %1338 = vmatprep.subr.mxu0 0.0
    %1339 = vmatpush1.msra.mxu0 0.0
    %1340 = vmatprep.subr.mxu0 0.0
    %1341 = vmatpush1.msra.mxu0 0.0
    %1342 = vmatprep.subr.mxu0 0.0
    %1343 = vmatpush1.msra.mxu0 0.0
    %1344 = vmatprep.subr.mxu0 0.0
    %1345 = vmatpush1.msra.mxu0 0.0
    %1346 = vmatprep.mubr.f32.mxu0 0.0
    %1347 = vmatmul.mubr.f32.gmra.mrb[0].mxu0 %v1280
    %v1348 = vpop.f32.mrb[0].mxu0
    %v1349 = vadd.f32 %v1276, %v1348
    %v1350 = vpop.f32.mrb[0].mxu0
    %v1351 = vadd.f32 %v1276, %v1350
    %1352 = vdwg.mxu0
    %1353 = vmatprep.subr.mxu0 %v1221
    %1354 = vmatpush1.msra.mxu0 %v1220
    %1355 = vmatprep.subr.mxu0 %v1227
    %1356 = vmatpush1.msra.mxu0 %v1226
    %1357 = vmatprep.subr.mxu0 %v1233
    %1358 = vmatpush1.msra.mxu0 %v1232
    %1359 = vmatprep.subr.mxu0 %v1239
    %1360 = vmatpush1.msra.mxu0 %v1238
    %1361 = vmatprep.subr.mxu0 %v1245
    %1362 = vmatpush1.msra.mxu0 %v1244
    %1363 = vmatprep.subr.mxu0 %v1251
    %1364 = vmatpush1.msra.mxu0 %v1250
    %1365 = vmatprep.subr.mxu0 %v1257
    %1366 = vmatpush1.msra.mxu0 %v1256
    %1367 = vmatprep.subr.mxu0 %v1263
    %1368 = vmatpush1.msra.mxu0 %v1262
    %1369 = vmatprep.subr.mxu0 %v1269
    %1370 = vmatpush1.msra.mxu0 %v1268
    %1371 = vmatprep.subr.mxu0 0.0
    %1372 = vmatpush1.msra.mxu0 0.0
    %1373 = vmatprep.subr.mxu0 0.0
    %1374 = vmatpush1.msra.mxu0 0.0
    %1375 = vmatprep.subr.mxu0 0.0
    %1376 = vmatpush1.msra.mxu0 0.0
    %1377 = vmatprep.subr.mxu0 0.0
    %1378 = vmatpush1.msra.mxu0 0.0
    %1379 = vmatprep.subr.mxu0 0.0
    %1380 = vmatpush1.msra.mxu0 0.0
    %1381 = vmatprep.subr.mxu0 0.0
    %1382 = vmatpush1.msra.mxu0 0.0
    %1383 = vmatprep.subr.mxu0 0.0
    %1384 = vmatpush1.msra.mxu0 0.0
    %1385 = vmatprep.subr.mxu0 0.0
    %1386 = vmatpush1.msra.mxu0 0.0
    %1387 = vmatprep.subr.mxu0 0.0
    %1388 = vmatpush1.msra.mxu0 0.0
    %1389 = vmatprep.subr.mxu0 0.0
    %1390 = vmatpush1.msra.mxu0 0.0
    %1391 = vmatprep.subr.mxu0 0.0
    %1392 = vmatpush1.msra.mxu0 0.0
    %1393 = vmatprep.subr.mxu0 0.0
    %1394 = vmatpush1.msra.mxu0 0.0
    %1395 = vmatprep.subr.mxu0 0.0
    %1396 = vmatpush1.msra.mxu0 0.0
    %1397 = vmatprep.subr.mxu0 0.0
    %1398 = vmatpush1.msra.mxu0 0.0
    %1399 = vmatprep.subr.mxu0 0.0
    %1400 = vmatpush1.msra.mxu0 0.0
    %1401 = vmatprep.subr.mxu0 0.0
    %1402 = vmatpush1.msra.mxu0 0.0
    %1403 = vmatprep.subr.mxu0 0.0
    %1404 = vmatpush1.msra.mxu0 0.0
    %1405 = vmatprep.subr.mxu0 0.0
    %1406 = vmatpush1.msra.mxu0 0.0
    %1407 = vmatprep.subr.mxu0 0.0
    %1408 = vmatpush1.msra.mxu0 0.0
    %1409 = vmatprep.subr.mxu0 0.0
    %1410 = vmatpush1.msra.mxu0 0.0
    %1411 = vmatprep.subr.mxu0 0.0
    %1412 = vmatpush1.msra.mxu0 0.0
    %1413 = vmatprep.subr.mxu0 0.0
    %1414 = vmatpush1.msra.mxu0 0.0
    %1415 = vmatprep.subr.mxu0 0.0
    %1416 = vmatpush1.msra.mxu0 0.0
    %1417 = vmatprep.mubr.f32.mxu0 0.0
    %1418 = vmatmul.mubr.f32.gmra.mrb[0].mxu0 %v1280
    %v1419 = vpop.f32.mrb[0].mxu0
    %v1420 = vadd.f32 %v1276, %v1419
    %v1421 = vpop.f32.mrb[0].mxu0
    %v1422 = vadd.f32 %v1276, %v1421
    %1423 = vdwg.mxu0
    %1424 = vmatprep.subr.mxu0 %v1223
    %1425 = vmatpush1.msra.mxu0 %v1222
    %1426 = vmatprep.subr.mxu0 %v1229
    %1427 = vmatpush1.msra.mxu0 %v1228
    %1428 = vmatprep.subr.mxu0 %v1235
    %1429 = vmatpush1.msra.mxu0 %v1234
    %1430 = vmatprep.subr.mxu0 %v1241
    %1431 = vmatpush1.msra.mxu0 %v1240
    %1432 = vmatprep.subr.mxu0 %v1247
    %1433 = vmatpush1.msra.mxu0 %v1246
    %1434 = vmatprep.subr.mxu0 %v1253
    %1435 = vmatpush1.msra.mxu0 %v1252
    %1436 = vmatprep.subr.mxu0 %v1259
    %1437 = vmatpush1.msra.mxu0 %v1258
    %1438 = vmatprep.subr.mxu0 %v1265
    %1439 = vmatpush1.msra.mxu0 %v1264
    %1440 = vmatprep.subr.mxu0 %v1271
    %1441 = vmatpush1.msra.mxu0 %v1270
    %1442 = vmatprep.subr.mxu0 0.0
    %1443 = vmatpush1.msra.mxu0 0.0
    %1444 = vmatprep.subr.mxu0 0.0
    %1445 = vmatpush1.msra.mxu0 0.0
    %1446 = vmatprep.subr.mxu0 0.0
    %1447 = vmatpush1.msra.mxu0 0.0
    %1448 = vmatprep.subr.mxu0 0.0
    %1449 = vmatpush1.msra.mxu0 0.0
    %1450 = vmatprep.subr.mxu0 0.0
    %1451 = vmatpush1.msra.mxu0 0.0
    %1452 = vmatprep.subr.mxu0 0.0
    %1453 = vmatpush1.msra.mxu0 0.0
    %1454 = vmatprep.subr.mxu0 0.0
    %1455 = vmatpush1.msra.mxu0 0.0
    %1456 = vmatprep.subr.mxu0 0.0
    %1457 = vmatpush1.msra.mxu0 0.0
    %1458 = vmatprep.subr.mxu0 0.0
    %1459 = vmatpush1.msra.mxu0 0.0
    %1460 = vmatprep.subr.mxu0 0.0
    %1461 = vmatpush1.msra.mxu0 0.0
    %1462 = vmatprep.subr.mxu0 0.0
    %1463 = vmatpush1.msra.mxu0 0.0
    %1464 = vmatprep.subr.mxu0 0.0
    %1465 = vmatpush1.msra.mxu0 0.0
    %1466 = vmatprep.subr.mxu0 0.0
    %1467 = vmatpush1.msra.mxu0 0.0
    %1468 = vmatprep.subr.mxu0 0.0
    %1469 = vmatpush1.msra.mxu0 0.0
    %1470 = vmatprep.subr.mxu0 0.0
    %1471 = vmatpush1.msra.mxu0 0.0
    %1472 = vmatprep.subr.mxu0 0.0
    %1473 = vmatpush1.msra.mxu0 0.0
    %1474 = vmatprep.subr.mxu0 0.0
    %1475 = vmatpush1.msra.mxu0 0.0
    %1476 = vmatprep.subr.mxu0 0.0
    %1477 = vmatpush1.msra.mxu0 0.0
    %1478 = vmatprep.subr.mxu0 0.0
    %1479 = vmatpush1.msra.mxu0 0.0
    %1480 = vmatprep.subr.mxu0 0.0
    %1481 = vmatpush1.msra.mxu0 0.0
    %1482 = vmatprep.subr.mxu0 0.0
    %1483 = vmatpush1.msra.mxu0 0.0
    %1484 = vmatprep.subr.mxu0 0.0
    %1485 = vmatpush1.msra.mxu0 0.0
    %1486 = vmatprep.subr.mxu0 0.0
    %1487 = vmatpush1.msra.mxu0 0.0
    %1488 = vmatprep.mubr.f32.mxu0 0.0
    %1489 = vmatmul.mubr.f32.gmra.mrb[0].mxu0 %v1280
    %v1490 = vpop.f32.mrb[0].mxu0
    %v1491 = vadd.f32 %v1276, %v1490
    %v1492 = vpop.f32.mrb[0].mxu0
    %v1493 = vadd.f32 %v1276, %v1492
    %1494 = vdwg.mxu0
    %v1495 = vld [vmem:[%s9] sm:$0xff]
    %v1496 = vld [vmem:[%s10] sm:$0xff]
    %v1497 = vmul.f32 %v1349, %v699
    %v1498 = vmul.f32 %v1351, %v703
    %v1499 = vmul.f32 %v1420, %v707
    %v1500 = vmul.f32 %v1422, %v711
    %v1501 = vmul.f32 %v1491, %v715
    %v1502 = vmul.f32 %v1493, %v719
    %v1503 = vadd.f32 %v1497, %v1498
    %v1504 = vadd.f32 %v1503, %v1499
    %v1505 = vadd.f32 %v1504, %v1500
    %v1506 = vadd.f32 %v1505, %v1501
    %v1507 = vadd.f32 %v1506, %v1502
    %1508 = vadd.xlane.f32.xlu0 %v1507
    %v1509 = vpop.xlane.xlu0 %1508
    %v1510 = vmul.f32 %v1497, %v1497
    %v1511 = vmul.f32 %v1498, %v1498
    %v1512 = vmul.f32 %v1499, %v1499
    %v1513 = vmul.f32 %v1500, %v1500
    %v1514 = vmul.f32 %v1501, %v1501
    %v1515 = vmul.f32 %v1502, %v1502
    %v1516 = vadd.f32 %v1510, %v1511
    %v1517 = vadd.f32 %v1516, %v1512
    %v1518 = vadd.f32 %v1517, %v1513
    %v1519 = vadd.f32 %v1518, %v1514
    %v1520 = vadd.f32 %v1519, %v1515
    %1521 = vadd.xlane.f32.xlu0 %v1520
    %v1522 = vpop.xlane.xlu0 %1521
    %v1523 = vmul.f32 %v1509, 0.001953125
    %v1524 = vmul.f32 %v1522, 0.001953125
    %v1525 = vmul.f32 %v1523, %v1523
    %v1526 = vsub.f32 %v1524, %v1525
    %v1527 = vadd.f32 %v1526, 1e-05
    %v1528 = vrsqrt.pop %v1527
    %v1529 = vmul.f32 %v1495, %v1528
    %v1530 = vmul.f32 %v1523, %v1529
    %v1531 = vsub.f32 %v1496, %v1530
    %1533 = vset.pattern.permute.xlu0 0
    %1534 = vperm.xlu0 %1533, %v1529
    %v1535 = vpop.permute.xlu0 %1534
    %v1537 = vmul.f32 %v1349, %v1535
    %v1538 = vmul.f32 %v1351, %v1535
    %v1539 = vmul.f32 %v1420, %v1535
    %v1540 = vmul.f32 %v1422, %v1535
    %v1541 = vmul.f32 %v1491, %v1535
    %v1542 = vmul.f32 %v1493, %v1535
    %1544 = vset.pattern.permute.xlu0 0
    %1545 = vperm.xlu0 %1544, %v1531
    %v1546 = vpop.permute.xlu0 %1545
    %v1548 = vadd.f32 %v1537, %v1546
    %v1549 = vadd.f32 %v1538, %v1546
    %v1550 = vadd.f32 %v1539, %v1546
    %v1551 = vadd.f32 %v1540, %v1546
    %v1552 = vadd.f32 %v1541, %v1546
    %v1553 = vadd.f32 %v1542, %v1546
    %v1554 = vld [vmem:[%s11] sm:$0xff]
    %v1555 = vld [vmem:[%s1] sm:$0xff]
    %v1556 = vld [vmem:[%s1 + $0x8] sm:$0xff]
    %v1557 = vld [vmem:[%s1 + $0x10] sm:$0xff]
    %v1558 = vld [vmem:[%s12] sm:$0xff]
    %1560 = vset.pattern.permute.xlu0 0
    %1561 = vperm.xlu0 %1560, %v1558
    %v1562 = vpop.permute.xlu0 %1561
    %v1567 = vcombine.high %v1555, %v1555
    %v1568 = vcombine.high %v1556, %v1556
    %v1569 = vcombine.high %v1557, %v1557
    %vm1570 = vcmask 31744
    %v1572 = vsel %vm1570, %v1554, 0
    %v1574 = vsel %vm461, %v1555, 0
    %v1576 = vsel %vm461, %v1567, 0
    %v1578 = vsel %vm461, %v1556, 0
    %v1580 = vsel %vm461, %v1568, 0
    %v1582 = vsel %vm461, %v1557, 0
    %v1584 = vsel %vm461, %v1569, 0
    %1586 = vmatprep.subr.mxu0 %v1576
    %1587 = vmatpush1.msra.mxu0 %v1574
    %1588 = vmatprep.subr.mxu0 0.0
    %1589 = vmatpush1.msra.mxu0 0.0
    %1590 = vmatprep.subr.mxu0 0.0
    %1591 = vmatpush1.msra.mxu0 0.0
    %1592 = vmatprep.subr.mxu0 0.0
    %1593 = vmatpush1.msra.mxu0 0.0
    %1594 = vmatprep.subr.mxu0 0.0
    %1595 = vmatpush1.msra.mxu0 0.0
    %1596 = vmatprep.subr.mxu0 0.0
    %1597 = vmatpush1.msra.mxu0 0.0
    %1598 = vmatprep.subr.mxu0 0.0
    %1599 = vmatpush1.msra.mxu0 0.0
    %1600 = vmatprep.subr.mxu0 0.0
    %1601 = vmatpush1.msra.mxu0 0.0
    %1602 = vmatprep.subr.mxu0 0.0
    %1603 = vmatpush1.msra.mxu0 0.0
    %1604 = vmatprep.subr.mxu0 0.0
    %1605 = vmatpush1.msra.mxu0 0.0
    %1606 = vmatprep.subr.mxu0 0.0
    %1607 = vmatpush1.msra.mxu0 0.0
    %1608 = vmatprep.subr.mxu0 0.0
    %1609 = vmatpush1.msra.mxu0 0.0
    %1610 = vmatprep.subr.mxu0 0.0
    %1611 = vmatpush1.msra.mxu0 0.0
    %1612 = vmatprep.subr.mxu0 0.0
    %1613 = vmatpush1.msra.mxu0 0.0
    %1614 = vmatprep.subr.mxu0 0.0
    %1615 = vmatpush1.msra.mxu0 0.0
    %1616 = vmatprep.subr.mxu0 0.0
    %1617 = vmatpush1.msra.mxu0 0.0
    %1618 = vmatprep.subr.mxu0 0.0
    %1619 = vmatpush1.msra.mxu0 0.0
    %1620 = vmatprep.subr.mxu0 0.0
    %1621 = vmatpush1.msra.mxu0 0.0
    %1622 = vmatprep.subr.mxu0 0.0
    %1623 = vmatpush1.msra.mxu0 0.0
    %1624 = vmatprep.subr.mxu0 0.0
    %1625 = vmatpush1.msra.mxu0 0.0
    %1626 = vmatprep.subr.mxu0 0.0
    %1627 = vmatpush1.msra.mxu0 0.0
    %1628 = vmatprep.subr.mxu0 0.0
    %1629 = vmatpush1.msra.mxu0 0.0
    %1630 = vmatprep.subr.mxu0 0.0
    %1631 = vmatpush1.msra.mxu0 0.0
    %1632 = vmatprep.subr.mxu0 0.0
    %1633 = vmatpush1.msra.mxu0 0.0
    %1634 = vmatprep.subr.mxu0 0.0
    %1635 = vmatpush1.msra.mxu0 0.0
    %1636 = vmatprep.subr.mxu0 0.0
    %1637 = vmatpush1.msra.mxu0 0.0
    %1638 = vmatprep.subr.mxu0 0.0
    %1639 = vmatpush1.msra.mxu0 0.0
    %1640 = vmatprep.subr.mxu0 0.0
    %1641 = vmatpush1.msra.mxu0 0.0
    %1642 = vmatprep.subr.mxu0 0.0
    %1643 = vmatpush1.msra.mxu0 0.0
    %1644 = vmatprep.subr.mxu0 0.0
    %1645 = vmatpush1.msra.mxu0 0.0
    %1646 = vmatprep.subr.mxu0 0.0
    %1647 = vmatpush1.msra.mxu0 0.0
    %1648 = vmatprep.subr.mxu0 0.0
    %1649 = vmatpush1.msra.mxu0 0.0
    %1650 = vmatprep.mubr.f32.mxu0 0.0
    %1651 = vmatmul.mubr.f32.gmra.mrb[0].mxu0 %v1572
    %v1652 = vpop.f32.mrb[0].mxu0
    %v1653 = vadd.f32 %v1562, %v1652
    %v1654 = vpop.f32.mrb[0].mxu0
    %v1655 = vadd.f32 %v1562, %v1654
    %1656 = vdwg.mxu0
    %1657 = vmatprep.subr.mxu0 %v1580
    %1658 = vmatpush1.msra.mxu0 %v1578
    %1659 = vmatprep.subr.mxu0 0.0
    %1660 = vmatpush1.msra.mxu0 0.0
    %1661 = vmatprep.subr.mxu0 0.0
    %1662 = vmatpush1.msra.mxu0 0.0
    %1663 = vmatprep.subr.mxu0 0.0
    %1664 = vmatpush1.msra.mxu0 0.0
    %1665 = vmatprep.subr.mxu0 0.0
    %1666 = vmatpush1.msra.mxu0 0.0
    %1667 = vmatprep.subr.mxu0 0.0
    %1668 = vmatpush1.msra.mxu0 0.0
    %1669 = vmatprep.subr.mxu0 0.0
    %1670 = vmatpush1.msra.mxu0 0.0
    %1671 = vmatprep.subr.mxu0 0.0
    %1672 = vmatpush1.msra.mxu0 0.0
    %1673 = vmatprep.subr.mxu0 0.0
    %1674 = vmatpush1.msra.mxu0 0.0
    %1675 = vmatprep.subr.mxu0 0.0
    %1676 = vmatpush1.msra.mxu0 0.0
    %1677 = vmatprep.subr.mxu0 0.0
    %1678 = vmatpush1.msra.mxu0 0.0
    %1679 = vmatprep.subr.mxu0 0.0
    %1680 = vmatpush1.msra.mxu0 0.0
    %1681 = vmatprep.subr.mxu0 0.0
    %1682 = vmatpush1.msra.mxu0 0.0
    %1683 = vmatprep.subr.mxu0 0.0
    %1684 = vmatpush1.msra.mxu0 0.0
    %1685 = vmatprep.subr.mxu0 0.0
    %1686 = vmatpush1.msra.mxu0 0.0
    %1687 = vmatprep.subr.mxu0 0.0
    %1688 = vmatpush1.msra.mxu0 0.0
    %1689 = vmatprep.subr.mxu0 0.0
    %1690 = vmatpush1.msra.mxu0 0.0
    %1691 = vmatprep.subr.mxu0 0.0
    %1692 = vmatpush1.msra.mxu0 0.0
    %1693 = vmatprep.subr.mxu0 0.0
    %1694 = vmatpush1.msra.mxu0 0.0
    %1695 = vmatprep.subr.mxu0 0.0
    %1696 = vmatpush1.msra.mxu0 0.0
    %1697 = vmatprep.subr.mxu0 0.0
    %1698 = vmatpush1.msra.mxu0 0.0
    %1699 = vmatprep.subr.mxu0 0.0
    %1700 = vmatpush1.msra.mxu0 0.0
    %1701 = vmatprep.subr.mxu0 0.0
    %1702 = vmatpush1.msra.mxu0 0.0
    %1703 = vmatprep.subr.mxu0 0.0
    %1704 = vmatpush1.msra.mxu0 0.0
    %1705 = vmatprep.subr.mxu0 0.0
    %1706 = vmatpush1.msra.mxu0 0.0
    %1707 = vmatprep.subr.mxu0 0.0
    %1708 = vmatpush1.msra.mxu0 0.0
    %1709 = vmatprep.subr.mxu0 0.0
    %1710 = vmatpush1.msra.mxu0 0.0
    %1711 = vmatprep.subr.mxu0 0.0
    %1712 = vmatpush1.msra.mxu0 0.0
    %1713 = vmatprep.subr.mxu0 0.0
    %1714 = vmatpush1.msra.mxu0 0.0
    %1715 = vmatprep.subr.mxu0 0.0
    %1716 = vmatpush1.msra.mxu0 0.0
    %1717 = vmatprep.subr.mxu0 0.0
    %1718 = vmatpush1.msra.mxu0 0.0
    %1719 = vmatprep.subr.mxu0 0.0
    %1720 = vmatpush1.msra.mxu0 0.0
    %1721 = vmatprep.mubr.f32.mxu0 0.0
    %1722 = vmatmul.mubr.f32.gmra.mrb[0].mxu0 %v1572
    %v1723 = vpop.f32.mrb[0].mxu0
    %v1724 = vadd.f32 %v1562, %v1723
    %v1725 = vpop.f32.mrb[0].mxu0
    %v1726 = vadd.f32 %v1562, %v1725
    %1727 = vdwg.mxu0
    %1728 = vmatprep.subr.mxu0 %v1584
    %1729 = vmatpush1.msra.mxu0 %v1582
    %1730 = vmatprep.subr.mxu0 0.0
    %1731 = vmatpush1.msra.mxu0 0.0
    %1732 = vmatprep.subr.mxu0 0.0
    %1733 = vmatpush1.msra.mxu0 0.0
    %1734 = vmatprep.subr.mxu0 0.0
    %1735 = vmatpush1.msra.mxu0 0.0
    %1736 = vmatprep.subr.mxu0 0.0
    %1737 = vmatpush1.msra.mxu0 0.0
    %1738 = vmatprep.subr.mxu0 0.0
    %1739 = vmatpush1.msra.mxu0 0.0
    %1740 = vmatprep.subr.mxu0 0.0
    %1741 = vmatpush1.msra.mxu0 0.0
    %1742 = vmatprep.subr.mxu0 0.0
    %1743 = vmatpush1.msra.mxu0 0.0
    %1744 = vmatprep.subr.mxu0 0.0
    %1745 = vmatpush1.msra.mxu0 0.0
    %1746 = vmatprep.subr.mxu0 0.0
    %1747 = vmatpush1.msra.mxu0 0.0
    %1748 = vmatprep.subr.mxu0 0.0
    %1749 = vmatpush1.msra.mxu0 0.0
    %1750 = vmatprep.subr.mxu0 0.0
    %1751 = vmatpush1.msra.mxu0 0.0
    %1752 = vmatprep.subr.mxu0 0.0
    %1753 = vmatpush1.msra.mxu0 0.0
    %1754 = vmatprep.subr.mxu0 0.0
    %1755 = vmatpush1.msra.mxu0 0.0
    %1756 = vmatprep.subr.mxu0 0.0
    %1757 = vmatpush1.msra.mxu0 0.0
    %1758 = vmatprep.subr.mxu0 0.0
    %1759 = vmatpush1.msra.mxu0 0.0
    %1760 = vmatprep.subr.mxu0 0.0
    %1761 = vmatpush1.msra.mxu0 0.0
    %1762 = vmatprep.subr.mxu0 0.0
    %1763 = vmatpush1.msra.mxu0 0.0
    %1764 = vmatprep.subr.mxu0 0.0
    %1765 = vmatpush1.msra.mxu0 0.0
    %1766 = vmatprep.subr.mxu0 0.0
    %1767 = vmatpush1.msra.mxu0 0.0
    %1768 = vmatprep.subr.mxu0 0.0
    %1769 = vmatpush1.msra.mxu0 0.0
    %1770 = vmatprep.subr.mxu0 0.0
    %1771 = vmatpush1.msra.mxu0 0.0
    %1772 = vmatprep.subr.mxu0 0.0
    %1773 = vmatpush1.msra.mxu0 0.0
    %1774 = vmatprep.subr.mxu0 0.0
    %1775 = vmatpush1.msra.mxu0 0.0
    %1776 = vmatprep.subr.mxu0 0.0
    %1777 = vmatpush1.msra.mxu0 0.0
    %1778 = vmatprep.subr.mxu0 0.0
    %1779 = vmatpush1.msra.mxu0 0.0
    %1780 = vmatprep.subr.mxu0 0.0
    %1781 = vmatpush1.msra.mxu0 0.0
    %1782 = vmatprep.subr.mxu0 0.0
    %1783 = vmatpush1.msra.mxu0 0.0
    %1784 = vmatprep.subr.mxu0 0.0
    %1785 = vmatpush1.msra.mxu0 0.0
    %1786 = vmatprep.subr.mxu0 0.0
    %1787 = vmatpush1.msra.mxu0 0.0
    %1788 = vmatprep.subr.mxu0 0.0
    %1789 = vmatpush1.msra.mxu0 0.0
    %1790 = vmatprep.subr.mxu0 0.0
    %1791 = vmatpush1.msra.mxu0 0.0
    %1792 = vmatprep.mubr.f32.mxu0 0.0
    %1793 = vmatmul.mubr.f32.gmra.mrb[0].mxu0 %v1572
    %v1794 = vpop.f32.mrb[0].mxu0
    %v1795 = vadd.f32 %v1562, %v1794
    %v1796 = vpop.f32.mrb[0].mxu0
    %v1797 = vadd.f32 %v1562, %v1796
    %1798 = vdwg.mxu0
    %v1799 = vadd.f32 %v1548, %v1653
    %v1800 = vadd.f32 %v1549, %v1655
    %v1801 = vadd.f32 %v1550, %v1724
    %v1802 = vadd.f32 %v1551, %v1726
    %v1803 = vadd.f32 %v1552, %v1795
    %v1804 = vadd.f32 %v1553, %v1797
    %v1805 = vmax.f32 %v1799, 0.0
    %v1806 = vmax.f32 %v1800, 0.0
    %v1807 = vmax.f32 %v1801, 0.0
    %v1808 = vmax.f32 %v1802, 0.0
    %v1809 = vmax.f32 %v1803, 0.0
    %v1810 = vmax.f32 %v1804, 0.0
    %1811 = vst [vmem:[#allocation4] sm:$0xff] %v1805
    %1812 = vst [vmem:[#allocation4 + $0x8] sm:$0xff] %v1806
    %1813 = vst [vmem:[#allocation4 + $0x10] sm:$0xff] %v1807
    %1814 = vst [vmem:[#allocation4 + $0x18] sm:$0xff] %v1808
    %1815 = vst [vmem:[#allocation4 + $0x20] sm:$0xff] %v1809
    %1816 = vst [vmem:[#allocation4 + $0x28] sm:$0xff] %v1810
    // Predicated region
    $region54: #{tpu_custom_call.1} parent=1 // pred_check
      _
    $region55: #{tpu_custom_call.1} parent=1 // pred_check_branch
      %1818 = sbr.rel (0) target = $region57
    $region56: #{tpu_custom_call.1} parent=1 // pred_region
      %s1820 = ssub.s32 768, 768
      %1821 = vsyncadd [#allocation5], %s1820
      %s1823 = sshll.u32 [#allocation4], 4
      %s1824 = int_to_ptr.vmem [resolvable:$true] %s1823
      %1826 = dma.vmem_to_hbm [thread:$0]  %s1824, 768, %s13, [#allocation5]
    $region57: #{tpu_custom_call.1} parent=1 // pred_fallthru
      _
    // Predicated region
    $region58: #{tpu_custom_call.1} parent=1 // pred_check
      _
    $region59: #{tpu_custom_call.1} parent=1 // pred_check_branch
      %1828 = sbr.rel (0) target = $region61
    $region60: #{tpu_custom_call.1} parent=1 // pred_region
      %1829 = dma.done [#allocation5], 768
    $region61: #{tpu_custom_call.1} parent=1 // pred_fallthru
      _
    %1830 = vsyncpa [#allocation5], 1

</llo_original>
